<compile_context>
chip_gen: v6e
topology: v6e:2x2x1
jax: 0.10.0
libtpu: 0.0.40
codegen_flags: <defaults>
</compile_context>

<pallas_src>
import functools
import math

import jax
import jax.numpy as jnp
from jax.experimental import pallas as pl
from jax.experimental.pallas import tpu as pltpu

VMEM_LIMIT_BYTES = 32 * 1024 * 1024   # safe on v5e/v6e/v7x; above v5e's 16 MiB default


# ---------------------------------------------------------------------------
# Kernel 1: fused 3x3 conv (stride 1, padding pre-applied) + BatchNorm + ReLU, NHWC.
# ---------------------------------------------------------------------------
def _conv3x3_bn_act_kernel(x_ref, w_ref, scale_ref, shift_ref, o_ref,
                           *, H, W, Cin, Cout, act):
    # x_ref    : (H+2, W+2, Cin)  zero-padded image for one batch element
    # w_ref    : (9, Cin, Cout)   pre-transposed taps (resident, no in-kernel .T)
    # scale_ref: (1, Cout)        folded inference BatchNorm scale
    # shift_ref: (1, Cout)        folded inference BatchNorm shift
    # o_ref    : (H, W, Cout)
    acc = jnp.zeros((H * W, Cout), jnp.float32)
    for dh in range(3):
        for dw in range(3):
            win = x_ref[dh:dh + H, dw:dw + W, :].reshape(H * W, Cin)
            w_tap = w_ref[3 * dh + dw]                     # (Cin, Cout)
            if Cin == 1:
                acc = acc + win * w_tap                    # VPU broadcast (avoids K=1 matmul)
            else:
                acc = acc + jnp.dot(win, w_tap, preferred_element_type=jnp.float32)
    y = acc * scale_ref[...] + shift_ref[...]
    if act:
        y = jnp.maximum(y, 0.0)
    o_ref[...] = y.reshape(H, W, Cout)


def conv3x3_bn_act(x_nhwc, w_taps, scale, shift, *, act=True):
    """Fused Conv2d(k=3, s=1, p=1, bias=False) + folded BN + optional ReLU."""
    B, H, W, Cin = x_nhwc.shape
    Cout = w_taps.shape[-1]
    xp = jnp.pad(x_nhwc, ((0, 0), (1, 1), (1, 1), (0, 0)))
    Hp, Wp = H + 2, W + 2
    kern = functools.partial(_conv3x3_bn_act_kernel,
                             H=H, W=W, Cin=Cin, Cout=Cout, act=act)
    flops = 2 * B * H * W * 9 * Cin * Cout
    bytes_accessed = 4 * (B * Hp * Wp * Cin + B * H * W * Cout + 9 * Cin * Cout + 2 * Cout)
    return pl.pallas_call(
        kern,
        out_shape=jax.ShapeDtypeStruct((B, H, W, Cout), jnp.float32),
        grid=(B,),
        in_specs=[
            pl.BlockSpec((None, Hp, Wp, Cin), lambda b: (b, 0, 0, 0)),
            pl.BlockSpec((9, Cin, Cout), lambda b: (0, 0, 0)),   # resident weights
            pl.BlockSpec((1, Cout), lambda b: (0, 0)),           # resident scale
            pl.BlockSpec((1, Cout), lambda b: (0, 0)),           # resident shift
        ],
        out_specs=pl.BlockSpec((None, H, W, Cout), lambda b: (b, 0, 0, 0)),
        compiler_params=pltpu.CompilerParams(
            dimension_semantics=("parallel",),
            vmem_limit_bytes=VMEM_LIMIT_BYTES),
        cost_estimate=pl.CostEstimate(flops=flops, transcendentals=0,
                                      bytes_accessed=bytes_accessed),
    )(xp, w_taps, scale, shift)


# ---------------------------------------------------------------------------
# Kernel 2: fused 1x1 conv + BatchNorm (+ residual add) (+ ReLU) on (N, Cin) rows.
# ---------------------------------------------------------------------------
def _pointwise_bn_kernel(x_ref, w_ref, scale_ref, shift_ref, *rest, act, has_residual):
    if has_residual:
        r_ref, o_ref = rest
    else:
        (o_ref,) = rest
    y = jnp.dot(x_ref[...], w_ref[...], preferred_element_type=jnp.float32)
    y = y * scale_ref[...] + shift_ref[...]
    if has_residual:
        y = y + r_ref[...]
    if act:
        y = jnp.maximum(y, 0.0)
    o_ref[...] = y


def _row_tile(n, cap=1024):
    if n <= cap:
        return n
    t = cap
    while t >= 8:
        if n % t == 0:
            return t
        t -= 8
    return n  # fall back to a single full block


def pointwise_conv_bn(x2d, w, scale, shift, *, act, residual=None):
    """Fused Conv2d(k=1, bias=False) + folded BN (+ residual add) (+ ReLU)."""
    N, Cin = x2d.shape
    Cout = w.shape[1]
    tn = _row_tile(N)
    kern = functools.partial(_pointwise_bn_kernel, act=act,
                             has_residual=residual is not None)
    in_specs = [
        pl.BlockSpec((tn, Cin), lambda i: (i, 0)),
        pl.BlockSpec((Cin, Cout), lambda i: (0, 0)),   # resident weights
        pl.BlockSpec((1, Cout), lambda i: (0, 0)),
        pl.BlockSpec((1, Cout), lambda i: (0, 0)),
    ]
    args = [x2d, w, scale, shift]
    if residual is not None:
        in_specs.append(pl.BlockSpec((tn, Cout), lambda i: (i, 0)))
        args.append(residual)
    flops = 2 * N * Cin * Cout
    bytes_accessed = 4 * (N * Cin + N * Cout + Cin * Cout
                          + (N * Cout if residual is not None else 0))
    return pl.pallas_call(
        kern,
        out_shape=jax.ShapeDtypeStruct((N, Cout), jnp.float32),
        grid=(N // tn,),
        in_specs=in_specs,
        out_specs=pl.BlockSpec((tn, Cout), lambda i: (i, 0)),
        compiler_params=pltpu.CompilerParams(
            dimension_semantics=("parallel",),
            vmem_limit_bytes=VMEM_LIMIT_BYTES),
        cost_estimate=pl.CostEstimate(flops=flops, transcendentals=0,
                                      bytes_accessed=bytes_accessed),
    )(*args)


# ---------------------------------------------------------------------------
# Parameter helpers (fold BN, pre-transpose conv weights in the wrapper).
# ---------------------------------------------------------------------------
# TODO(synk): BatchNorm is implemented in inference mode (running stats folded to a
#             per-channel scale/shift); training-mode batch statistics are not computed.
def fold_bn(bn, eps=1e-5):
    scale = bn["gamma"] / jnp.sqrt(bn["var"] + eps)
    shift = bn["beta"] - bn["mean"] * scale
    return scale.reshape(1, -1), shift.reshape(1, -1)


def conv3x3_w_to_taps(w_oihw):
    cout, cin, kh, kw = w_oihw.shape
    return jnp.transpose(w_oihw, (2, 3, 1, 0)).reshape(kh * kw, cin, cout)


def conv1x1_w_to_2d(w_oihw):
    return jnp.transpose(w_oihw[:, :, 0, 0])     # (Cin, Cout)


def expand_grouped(w_grouped, groups):
    """(Cout, Cin//groups, kh, kw) grouped weight -> block-diagonal dense (Cout, Cin, kh, kw)."""
    cout, cin_g, kh, kw = w_grouped.shape
    cin = cin_g * groups
    out_g = cout // groups
    dense = jnp.zeros((cout, cin, kh, kw), w_grouped.dtype)
    for g in range(groups):
        dense = dense.at[g * out_g:(g + 1) * out_g,
                         g * cin_g:(g + 1) * cin_g].set(w_grouped[g * out_g:(g + 1) * out_g])
    return dense


# ---------------------------------------------------------------------------
# Parameter init replicating the PyTorch module's init (kaiming fan_out, BN=1/0).
# ---------------------------------------------------------------------------
def _init_conv(key, cout, cin, k):
    fan_out = cout * k * k
    std = math.sqrt(2.0 / fan_out)
    return std * jax.random.normal(key, (cout, cin, k, k), jnp.float32)


def _init_bn(c):
    return dict(gamma=jnp.ones((c,), jnp.float32), beta=jnp.zeros((c,), jnp.float32),
                mean=jnp.zeros((c,), jnp.float32), var=jnp.ones((c,), jnp.float32))


def _init_bottleneck(key, in_ch, out_ch, stride, cardinality, base_width, widen_factor):
    width_ratio = out_ch / (widen_factor * 64.0)
    D = cardinality * int(base_width * width_ratio)
    k = jax.random.split(key, 4)
    p = dict(stride=stride, cardinality=cardinality, in_ch=in_ch, out_ch=out_ch, D=D)
    p["conv_reduce"] = _init_conv(k[0], D, in_ch, 1)
    p["bn_reduce"] = _init_bn(D)
    p["conv_conv"] = _init_conv(k[1], D, D // cardinality, 3)   # grouped weight
    p["bn"] = _init_bn(D)
    p["conv_expand"] = _init_conv(k[2], out_ch, D, 1)
    p["bn_expand"] = _init_bn(out_ch)
    if in_ch != out_ch:
        p["shortcut_conv"] = _init_conv(k[3], out_ch, in_ch, 1)
        p["shortcut_bn"] = _init_bn(out_ch)
    return p


def init_resnext(key, in_planes=32, cardinality=32, depth=3, base_width=20, widen_factor=4):
    block_depth = (depth - 2) // 9
    stages = [in_planes, in_planes * widen_factor,
              in_planes * 2 * widen_factor, in_planes * 4 * widen_factor]
    keys = jax.random.split(key, max(1 + 3 * block_depth, 1))
    params = dict(conv1=_init_conv(keys[0], in_planes, 1, 3), bn1=_init_bn(in_planes),
                  stages=[])
    ki = 1
    for s in range(3):
        in_c, out_c = stages[s], stages[s + 1]
        pool_stride = 1 if s == 0 else 2
        blocks = []
        for b in range(block_depth):
            if b == 0:
                blocks.append(_init_bottleneck(keys[ki], in_c, out_c, pool_stride,
                                               cardinality, base_width, widen_factor))
            else:
                blocks.append(_init_bottleneck(keys[ki], out_c, out_c, 1,
                                               cardinality, base_width, widen_factor))
            ki += 1
        params["stages"].append(blocks)
    return params


# ---------------------------------------------------------------------------
# Pallas forward pass.
# ---------------------------------------------------------------------------
def bottleneck_forward_pallas(p, x):
    B, H, W, Cin = x.shape
    s, card, D, Cout = p["stride"], p["cardinality"], p["D"], p["out_ch"]

    # 1x1 reduce + BN + ReLU
    sc, sh = fold_bn(p["bn_reduce"])
    h = pointwise_conv_bn(x.reshape(-1, Cin), conv1x1_w_to_2d(p["conv_reduce"]),
                          sc, sh, act=True).reshape(B, H, W, D)

    # grouped 3x3 conv + BN + ReLU; stride handled by subsampling the stride-1 result
    # TODO(synk): dedicated grouped/strided conv kernel (block-diagonal dense weights +
    #             stride-1 conv followed by subsampling is exact but does extra MAC work).
    sc, sh = fold_bn(p["bn"])
    taps = conv3x3_w_to_taps(expand_grouped(p["conv_conv"], card))
    h = conv3x3_bn_act(h, taps, sc, sh, act=True)
    if s != 1:
        h = h[:, ::s, ::s, :]
    Ho, Wo = h.shape[1], h.shape[2]

    # shortcut branch
    if "shortcut_conv" in p:
        sc, sh = fold_bn(p["shortcut_bn"])
        xs = x[:, ::s, ::s, :]                       # 1x1 stride-s conv == subsample + 1x1
        res = pointwise_conv_bn(xs.reshape(-1, Cin), conv1x1_w_to_2d(p["shortcut_conv"]),
                                sc, sh, act=False).reshape(B, Ho, Wo, Cout)
    else:
        res = x[:, ::s, ::s, :]

    # 1x1 expand + BN + residual add + ReLU fused in one kernel
    sc, sh = fold_bn(p["bn_expand"])
    out = pointwise_conv_bn(h.reshape(-1, D), conv1x1_w_to_2d(p["conv_expand"]),
                            sc, sh, act=True,
                            residual=res.reshape(-1, Cout)).reshape(B, Ho, Wo, Cout)
    return out


def resnext_forward_pallas(params, x_nchw):
    # NCHW -> NHWC (stem has C=1, so this is a pure reshape, no data movement)
    x = jnp.transpose(x_nchw, (0, 2, 3, 1))
    sc, sh = fold_bn(params["bn1"])
    x = conv3x3_bn_act(x, conv3x3_w_to_taps(params["conv1"]), sc, sh, act=True)
    for stage in params["stages"]:
        for blk in stage:
            x = bottleneck_forward_pallas(blk, x)
    return jnp.transpose(x, (0, 3, 1, 2))            # back to NCHW (PyTorch layout)


# ---------------------------------------------------------------------------
# Pure-JAX reference (eval-mode BN) for verification.
# ---------------------------------------------------------------------------
def _ref_conv(x, w_oihw, stride, padding, groups=1):
    w_hwio = jnp.transpose(w_oihw, (2, 3, 1, 0))
    return jax.lax.conv_general_dilated(
        x, w_hwio, window_strides=(stride, stride),
        padding=((padding, padding), (padding, padding)),
        dimension_numbers=("NHWC", "HWIO", "NHWC"),
        feature_group_count=groups,
        precision=jax.lax.Precision.HIGHEST)


def _ref_bn(x, bn, eps=1e-5):
    scale = bn["gamma"] / jnp.sqrt(bn["var"] + eps)
    shift = bn["beta"] - bn["mean"] * scale
    return x * scale + shift


def _ref_bottleneck(p, x):
    s, card = p["stride"], p["cardinality"]
    b = jax.nn.relu(_ref_bn(_ref_conv(x, p["conv_reduce"], 1, 0), p["bn_reduce"]))
    b = jax.nn.relu(_ref_bn(_ref_conv(b, p["conv_conv"], s, 1, groups=card), p["bn"]))
    b = _ref_bn(_ref_conv(b, p["conv_expand"], 1, 0), p["bn_expand"])
    if "shortcut_conv" in p:
        r = _ref_bn(_ref_conv(x, p["shortcut_conv"], s, 0), p["shortcut_bn"])
    else:
        r = x
    return jax.nn.relu(r + b)


def resnext_forward_reference(params, x_nchw):
    x = jnp.transpose(x_nchw, (0, 2, 3, 1))
    x = jax.nn.relu(_ref_bn(_ref_conv(x, params["conv1"], 1, 1), params["bn1"]))
    for stage in params["stages"]:
        for blk in stage:
            x = _ref_bottleneck(blk, x)
    return jnp.transpose(x, (0, 3, 1, 2))


if __name__ == "__main__":
    key = jax.random.PRNGKey(0)
    kx, kp1, kp2 = jax.random.split(key, 3)
    # conv_1_3x3 takes single-channel images: (B, 1, H, W)
    x = jax.random.normal(kx, (2, 1, 16, 16), jnp.float32)

    # (a) the module's default config (depth=3 -> block_depth=0, stages are empty):
    #     forward == fused conv3x3 + BN + ReLU stem kernel.
    params = init_resnext(kp1, in_planes=32, cardinality=32, depth=3,
                          base_width=20, widen_factor=4)
    out = jax.block_until_ready(resnext_forward_pallas(params, x))
    ref = resnext_forward_reference(params, x)
    assert out.shape == (2, 32, 16, 16), out.shape
    assert jnp.allclose(out, ref, atol=5e-4, rtol=5e-4), float(jnp.max(jnp.abs(out - ref)))

    # (b) a tiny depth=11 config (one bottleneck per stage) to exercise the bottleneck
    #     kernels: grouped 3x3 conv, strided stages, conv shortcut, fused residual+ReLU.
    params_s = init_resnext(kp2, in_planes=8, cardinality=2, depth=11,
                            base_width=8, widen_factor=4)
    out_s = jax.block_until_ready(resnext_forward_pallas(params_s, x))
    ref_s = resnext_forward_reference(params_s, x)
    assert out_s.shape == (2, 128, 4, 4), out_s.shape
    assert jnp.allclose(out_s, ref_s, atol=5e-4, rtol=5e-4), float(jnp.max(jnp.abs(out_s - ref_s)))

    print("KERNEL_OK")
</pallas_src>

<mosaic_0001>
module attributes {stable_mosaic.version = 11 : i64} {
  func.func @_conv3x3_bn_act_kernel(%arg0: i32, %arg1: memref<1x18x18x1xf32, #tpu.memory_space<vmem>>, %arg2: memref<9x1x32xf32, #tpu.memory_space<vmem>>, %arg3: memref<1x32xf32, #tpu.memory_space<vmem>>, %arg4: memref<1x32xf32, #tpu.memory_space<vmem>>, %arg5: memref<1x16x16x32xf32, #tpu.memory_space<vmem>>) attributes {dimension_semantics = [#tpu.dimension_semantics<parallel>], iteration_bounds = array<i64: 2>, scalar_prefetch = 0 : i64, scratch_operands = 0 : i64, tpu.core_type = #tpu.core_type<tc>, window_params = [{transform_indices = @transform_0, window_bounds = array<i64: 1, 18, 18, 1>}, {pipeline_mode = #tpu.pipeline_mode<synchronous>, transform_indices = @transform_1, window_bounds = array<i64: 9, 1, 32>}, {pipeline_mode = #tpu.pipeline_mode<synchronous>, transform_indices = @transform_2, window_bounds = array<i64: 1, 32>}, {pipeline_mode = #tpu.pipeline_mode<synchronous>, transform_indices = @transform_3, window_bounds = array<i64: 1, 32>}, {transform_indices = @transform_4, window_bounds = array<i64: 1, 16, 16, 32>}]} {
    %cst = arith.constant 0.000000e+00 : f32
    %0 = vector.broadcast %cst : f32 to vector<256x32xf32>
    %c0 = arith.constant 0 : index
    %c0_0 = arith.constant 0 : index
    %c0_1 = arith.constant 0 : index
    %c0_2 = arith.constant 0 : index
    %1 = vector.load %arg1[%c0, %c0_0, %c0_1, %c0_2] : memref<1x18x18x1xf32, #tpu.memory_space<vmem>>, vector<1x16x16x1xf32>
    %2 = vector.shape_cast %1 : vector<1x16x16x1xf32> to vector<16x16x1xf32>
    %3 = vector.shape_cast %2 : vector<16x16x1xf32> to vector<256x1xf32>
    %c0_3 = arith.constant 0 : index
    %c0_4 = arith.constant 0 : index
    %c0_5 = arith.constant 0 : index
    %4 = vector.load %arg2[%c0_3, %c0_4, %c0_5] : memref<9x1x32xf32, #tpu.memory_space<vmem>>, vector<1x1x32xf32>
    %5 = vector.shape_cast %4 : vector<1x1x32xf32> to vector<1x32xf32>
    %6 = vector.broadcast %3 : vector<256x1xf32> to vector<256x32xf32>
    %7 = vector.broadcast %5 : vector<1x32xf32> to vector<256x32xf32>
    %8 = arith.mulf %6, %7 : vector<256x32xf32>
    %9 = arith.addf %0, %8 : vector<256x32xf32>
    %c0_6 = arith.constant 0 : index
    %c0_7 = arith.constant 0 : index
    %c1 = arith.constant 1 : index
    %c0_8 = arith.constant 0 : index
    %10 = vector.load %arg1[%c0_6, %c0_7, %c1, %c0_8] : memref<1x18x18x1xf32, #tpu.memory_space<vmem>>, vector<1x16x16x1xf32>
    %11 = vector.shape_cast %10 : vector<1x16x16x1xf32> to vector<16x16x1xf32>
    %12 = vector.shape_cast %11 : vector<16x16x1xf32> to vector<256x1xf32>
    %c1_9 = arith.constant 1 : index
    %c0_10 = arith.constant 0 : index
    %c0_11 = arith.constant 0 : index
    %13 = vector.load %arg2[%c1_9, %c0_10, %c0_11] : memref<9x1x32xf32, #tpu.memory_space<vmem>>, vector<1x1x32xf32>
    %14 = vector.shape_cast %13 : vector<1x1x32xf32> to vector<1x32xf32>
    %15 = vector.broadcast %12 : vector<256x1xf32> to vector<256x32xf32>
    %16 = vector.broadcast %14 : vector<1x32xf32> to vector<256x32xf32>
    %17 = arith.mulf %15, %16 : vector<256x32xf32>
    %18 = arith.addf %9, %17 : vector<256x32xf32>
    %c0_12 = arith.constant 0 : index
    %c0_13 = arith.constant 0 : index
    %c2 = arith.constant 2 : index
    %c0_14 = arith.constant 0 : index
    %19 = vector.load %arg1[%c0_12, %c0_13, %c2, %c0_14] : memref<1x18x18x1xf32, #tpu.memory_space<vmem>>, vector<1x16x16x1xf32>
    %20 = vector.shape_cast %19 : vector<1x16x16x1xf32> to vector<16x16x1xf32>
    %21 = vector.shape_cast %20 : vector<16x16x1xf32> to vector<256x1xf32>
    %c2_15 = arith.constant 2 : index
    %c0_16 = arith.constant 0 : index
    %c0_17 = arith.constant 0 : index
    %22 = vector.load %arg2[%c2_15, %c0_16, %c0_17] : memref<9x1x32xf32, #tpu.memory_space<vmem>>, vector<1x1x32xf32>
    %23 = vector.shape_cast %22 : vector<1x1x32xf32> to vector<1x32xf32>
    %24 = vector.broadcast %21 : vector<256x1xf32> to vector<256x32xf32>
    %25 = vector.broadcast %23 : vector<1x32xf32> to vector<256x32xf32>
    %26 = arith.mulf %24, %25 : vector<256x32xf32>
    %27 = arith.addf %18, %26 : vector<256x32xf32>
    %c0_18 = arith.constant 0 : index
    %c1_19 = arith.constant 1 : index
    %c0_20 = arith.constant 0 : index
    %c0_21 = arith.constant 0 : index
    %28 = vector.load %arg1[%c0_18, %c1_19, %c0_20, %c0_21] : memref<1x18x18x1xf32, #tpu.memory_space<vmem>>, vector<1x16x16x1xf32>
    %29 = vector.shape_cast %28 : vector<1x16x16x1xf32> to vector<16x16x1xf32>
    %30 = vector.shape_cast %29 : vector<16x16x1xf32> to vector<256x1xf32>
    %c3 = arith.constant 3 : index
    %c0_22 = arith.constant 0 : index
    %c0_23 = arith.constant 0 : index
    %31 = vector.load %arg2[%c3, %c0_22, %c0_23] : memref<9x1x32xf32, #tpu.memory_space<vmem>>, vector<1x1x32xf32>
    %32 = vector.shape_cast %31 : vector<1x1x32xf32> to vector<1x32xf32>
    %33 = vector.broadcast %30 : vector<256x1xf32> to vector<256x32xf32>
    %34 = vector.broadcast %32 : vector<1x32xf32> to vector<256x32xf32>
    %35 = arith.mulf %33, %34 : vector<256x32xf32>
    %36 = arith.addf %27, %35 : vector<256x32xf32>
    %c0_24 = arith.constant 0 : index
    %c1_25 = arith.constant 1 : index
    %c1_26 = arith.constant 1 : index
    %c0_27 = arith.constant 0 : index
    %37 = vector.load %arg1[%c0_24, %c1_25, %c1_26, %c0_27] : memref<1x18x18x1xf32, #tpu.memory_space<vmem>>, vector<1x16x16x1xf32>
    %38 = vector.shape_cast %37 : vector<1x16x16x1xf32> to vector<16x16x1xf32>
    %39 = vector.shape_cast %38 : vector<16x16x1xf32> to vector<256x1xf32>
    %c4 = arith.constant 4 : index
    %c0_28 = arith.constant 0 : index
    %c0_29 = arith.constant 0 : index
    %40 = vector.load %arg2[%c4, %c0_28, %c0_29] : memref<9x1x32xf32, #tpu.memory_space<vmem>>, vector<1x1x32xf32>
    %41 = vector.shape_cast %40 : vector<1x1x32xf32> to vector<1x32xf32>
    %42 = vector.broadcast %39 : vector<256x1xf32> to vector<256x32xf32>
    %43 = vector.broadcast %41 : vector<1x32xf32> to vector<256x32xf32>
    %44 = arith.mulf %42, %43 : vector<256x32xf32>
    %45 = arith.addf %36, %44 : vector<256x32xf32>
    %c0_30 = arith.constant 0 : index
    %c1_31 = arith.constant 1 : index
    %c2_32 = arith.constant 2 : index
    %c0_33 = arith.constant 0 : index
    %46 = vector.load %arg1[%c0_30, %c1_31, %c2_32, %c0_33] : memref<1x18x18x1xf32, #tpu.memory_space<vmem>>, vector<1x16x16x1xf32>
    %47 = vector.shape_cast %46 : vector<1x16x16x1xf32> to vector<16x16x1xf32>
    %48 = vector.shape_cast %47 : vector<16x16x1xf32> to vector<256x1xf32>
    %c5 = arith.constant 5 : index
    %c0_34 = arith.constant 0 : index
    %c0_35 = arith.constant 0 : index
    %49 = vector.load %arg2[%c5, %c0_34, %c0_35] : memref<9x1x32xf32, #tpu.memory_space<vmem>>, vector<1x1x32xf32>
    %50 = vector.shape_cast %49 : vector<1x1x32xf32> to vector<1x32xf32>
    %51 = vector.broadcast %48 : vector<256x1xf32> to vector<256x32xf32>
    %52 = vector.broadcast %50 : vector<1x32xf32> to vector<256x32xf32>
    %53 = arith.mulf %51, %52 : vector<256x32xf32>
    %54 = arith.addf %45, %53 : vector<256x32xf32>
    %c0_36 = arith.constant 0 : index
    %c2_37 = arith.constant 2 : index
    %c0_38 = arith.constant 0 : index
    %c0_39 = arith.constant 0 : index
    %55 = vector.load %arg1[%c0_36, %c2_37, %c0_38, %c0_39] : memref<1x18x18x1xf32, #tpu.memory_space<vmem>>, vector<1x16x16x1xf32>
    %56 = vector.shape_cast %55 : vector<1x16x16x1xf32> to vector<16x16x1xf32>
    %57 = vector.shape_cast %56 : vector<16x16x1xf32> to vector<256x1xf32>
    %c6 = arith.constant 6 : index
    %c0_40 = arith.constant 0 : index
    %c0_41 = arith.constant 0 : index
    %58 = vector.load %arg2[%c6, %c0_40, %c0_41] : memref<9x1x32xf32, #tpu.memory_space<vmem>>, vector<1x1x32xf32>
    %59 = vector.shape_cast %58 : vector<1x1x32xf32> to vector<1x32xf32>
    %60 = vector.broadcast %57 : vector<256x1xf32> to vector<256x32xf32>
    %61 = vector.broadcast %59 : vector<1x32xf32> to vector<256x32xf32>
    %62 = arith.mulf %60, %61 : vector<256x32xf32>
    %63 = arith.addf %54, %62 : vector<256x32xf32>
    %c0_42 = arith.constant 0 : index
    %c2_43 = arith.constant 2 : index
    %c1_44 = arith.constant 1 : index
    %c0_45 = arith.constant 0 : index
    %64 = vector.load %arg1[%c0_42, %c2_43, %c1_44, %c0_45] : memref<1x18x18x1xf32, #tpu.memory_space<vmem>>, vector<1x16x16x1xf32>
    %65 = vector.shape_cast %64 : vector<1x16x16x1xf32> to vector<16x16x1xf32>
    %66 = vector.shape_cast %65 : vector<16x16x1xf32> to vector<256x1xf32>
    %c7 = arith.constant 7 : index
    %c0_46 = arith.constant 0 : index
    %c0_47 = arith.constant 0 : index
    %67 = vector.load %arg2[%c7, %c0_46, %c0_47] : memref<9x1x32xf32, #tpu.memory_space<vmem>>, vector<1x1x32xf32>
    %68 = vector.shape_cast %67 : vector<1x1x32xf32> to vector<1x32xf32>
    %69 = vector.broadcast %66 : vector<256x1xf32> to vector<256x32xf32>
    %70 = vector.broadcast %68 : vector<1x32xf32> to vector<256x32xf32>
    %71 = arith.mulf %69, %70 : vector<256x32xf32>
    %72 = arith.addf %63, %71 : vector<256x32xf32>
    %c0_48 = arith.constant 0 : index
    %c2_49 = arith.constant 2 : index
    %c2_50 = arith.constant 2 : index
    %c0_51 = arith.constant 0 : index
    %73 = vector.load %arg1[%c0_48, %c2_49, %c2_50, %c0_51] : memref<1x18x18x1xf32, #tpu.memory_space<vmem>>, vector<1x16x16x1xf32>
    %74 = vector.shape_cast %73 : vector<1x16x16x1xf32> to vector<16x16x1xf32>
    %75 = vector.shape_cast %74 : vector<16x16x1xf32> to vector<256x1xf32>
    %c8 = arith.constant 8 : index
    %c0_52 = arith.constant 0 : index
    %c0_53 = arith.constant 0 : index
    %76 = vector.load %arg2[%c8, %c0_52, %c0_53] : memref<9x1x32xf32, #tpu.memory_space<vmem>>, vector<1x1x32xf32>
    %77 = vector.shape_cast %76 : vector<1x1x32xf32> to vector<1x32xf32>
    %78 = vector.broadcast %75 : vector<256x1xf32> to vector<256x32xf32>
    %79 = vector.broadcast %77 : vector<1x32xf32> to vector<256x32xf32>
    %80 = arith.mulf %78, %79 : vector<256x32xf32>
    %81 = arith.addf %72, %80 : vector<256x32xf32>
    %c0_54 = arith.constant 0 : index
    %c0_55 = arith.constant 0 : index
    %82 = vector.load %arg3[%c0_54, %c0_55] : memref<1x32xf32, #tpu.memory_space<vmem>>, vector<1x32xf32>
    %83 = vector.broadcast %82 : vector<1x32xf32> to vector<256x32xf32>
    %84 = arith.mulf %81, %83 : vector<256x32xf32>
    %c0_56 = arith.constant 0 : index
    %c0_57 = arith.constant 0 : index
    %85 = vector.load %arg4[%c0_56, %c0_57] : memref<1x32xf32, #tpu.memory_space<vmem>>, vector<1x32xf32>
    %86 = vector.broadcast %85 : vector<1x32xf32> to vector<256x32xf32>
    %87 = arith.addf %84, %86 : vector<256x32xf32>
    %cst_58 = arith.constant 0.000000e+00 : f32
    %88 = vector.broadcast %cst_58 : f32 to vector<256x32xf32>
    %89 = arith.maximumf %87, %88 : vector<256x32xf32>
    %90 = vector.shape_cast %89 : vector<256x32xf32> to vector<16x16x32xf32>
    %c0_59 = arith.constant 0 : index
    %c0_60 = arith.constant 0 : index
    %c0_61 = arith.constant 0 : index
    %c0_62 = arith.constant 0 : index
    %91 = vector.load %arg5[%c0_59, %c0_60, %c0_61, %c0_62] : memref<1x16x16x32xf32, #tpu.memory_space<vmem>>, vector<1x16x16x32xf32>
    %92 = vector.shape_cast %91 : vector<1x16x16x32xf32> to vector<16x16x32xf32>
    %93 = vector.shape_cast %90 : vector<16x16x32xf32> to vector<1x16x16x32xf32>
    tpu.vector_store %arg5[%c0_59, %c0_60, %c0_61, %c0_62], %93 {strides = array<i32>} : memref<1x16x16x32xf32, #tpu.memory_space<vmem>>, vector<1x16x16x32xf32>,
    return
  }
  func.func @transform_0(%arg0: i32) -> (i32, i32, i32, i32) {
    %c0_i32 = arith.constant 0 : i32
    %c0_i32_0 = arith.constant 0 : i32
    %c0_i32_1 = arith.constant 0 : i32
    %c0_i32_2 = arith.constant 0 : i32
    return %arg0, %c0_i32, %c0_i32_0, %c0_i32_1 : i32, i32, i32, i32
  }
  func.func @transform_1(%arg0: i32) -> (i32, i32, i32) {
    %c0_i32 = arith.constant 0 : i32
    %c0_i32_0 = arith.constant 0 : i32
    %c0_i32_1 = arith.constant 0 : i32
    %c0_i32_2 = arith.constant 0 : i32
    return %c0_i32, %c0_i32_0, %c0_i32_1 : i32, i32, i32
  }
  func.func @transform_2(%arg0: i32) -> (i32, i32) {
    %c0_i32 = arith.constant 0 : i32
    %c0_i32_0 = arith.constant 0 : i32
    %c0_i32_1 = arith.constant 0 : i32
    return %c0_i32, %c0_i32_0 : i32, i32
  }
  func.func @transform_3(%arg0: i32) -> (i32, i32) {
    %c0_i32 = arith.constant 0 : i32
    %c0_i32_0 = arith.constant 0 : i32
    %c0_i32_1 = arith.constant 0 : i32
    return %c0_i32, %c0_i32_0 : i32, i32
  }
  func.func @transform_4(%arg0: i32) -> (i32, i32, i32, i32) {
    %c0_i32 = arith.constant 0 : i32
    %c0_i32_0 = arith.constant 0 : i32
    %c0_i32_1 = arith.constant 0 : i32
    %c0_i32_2 = arith.constant 0 : i32
    return %arg0, %c0_i32, %c0_i32_0, %c0_i32_1 : i32, i32, i32, i32
  }
}

</mosaic_0001>

<llo_original>
// kernel: tpu_custom_call.1
$region0: #{tpu_custom_call.1}
  #allocation0 [shape = 'u32[]', space=smem, size = 0x4, offset = 0x4, fixed_abs, tag = 'smem constant byte address 0x4 - core index']
  #allocation1 [shape = 'u32[144,128]{1,0:T(1,128)}', space=vmem, size = 0x12000, scoped, tag = 'internal scratch']
  %s0 = inlined_call_operand.vmem [shape: f32[2,18,18,1], index: 0, kind: input, shape index: {}]
  %s1 = inlined_call_operand.vmem [shape: f32[9,1,32], index: 1, kind: input, shape index: {}]
  %s2 = inlined_call_operand.vmem [shape: f32[1,32], index: 2, kind: input, shape index: {}]
  %s3 = inlined_call_operand.vmem [shape: f32[1,32], index: 3, kind: input, shape index: {}]
  %s4 = inlined_call_operand.hbm [shape: f32[2,16,16,32], index: 4, kind: output, shape index: {}]
  %s5 = sld [smem:[#allocation0]]
  $region49: #{tpu_custom_call.1} parent=0
    _
  %s7 = ssub.s32 1, %s5
  %s8 = scalar_select 0, %s7, %s5
  $region1: #{tpu_custom_call.1} parent=0
    #allocation2 [shape = 'u8[262144]{0}', space=vmem, size = 0x40000, scoped, tag = 'output window, operand 0']
    #allocation3 [shape = 's32[2]{0}', space=sflag, size = 0x8, scoped, tag = 'scoped memory for tpu_custom_call.1']
    %9 = vsyncpa [#allocation3], 0
    %s10 = scalar_lea.sflag [#allocation3], 1
    %11 = vsyncpa %s10, 0
    loop: start=0, step=1, limit=4
    $region2: #{tpu_custom_call.1} parent=1 // loop_pre_header
      _
    $region3: #{tpu_custom_call.1} parent=1 // loop_header
      %s13 = sphi 0, %s17
      %p14 = scmp.ge.s32.totalorder %s13, 4
      %s23 = sphi 0, %s25
      %s26 = sphi 0, %s23
      %s27 = sphi 0, %s26
      %s43 = sphi 0, %s27
      %s47 = sphi 0, %s47
      %s49 = sphi 0, %s47
      %s50 = sphi 0, %s49
      %s64 = sphi 0, %s50
      %s68 = sphi 0, %s68
      %s70 = sphi 0, %s68
      %s71 = sphi 0, %s70
      %s85 = sphi 0, %s71
      %s89 = sphi 0, %s89
      %s91 = sphi 0, %s89
      %s92 = sphi 0, %s91
      %s106 = sphi 0, %s92
      %s112 = sphi 0, %s114
      %s115 = sphi 0, %s112
      %s116 = sphi 0, %s115
      %s132 = sphi 0, %s116
    $region4: #{tpu_custom_call.1} parent=1 // loop_header_branch
      %16 = sbr.rel (%p14) target = $region8
    $region5: #{tpu_custom_call.1} parent=1 // loop_body
      %s18 = ssub.s32 %s13, 1
      %s19 = ssub.s32 %s13, 2
      %s20 = sadd.s32 %s13, 1
      %s21 = ssub.s32 %s13, %s20
      %p22 = scmp.eq.s32.totalorder %s21, 0
      %s24 = sadd.s32 %s23, 1
      %s25 = scalar_select %p22, %s23, %s24
      %p28 = pneg %p22
      %p29 = scmp.eq.s32.totalorder %s13, 1
      %p30 = por %p28, %p29
      %p31 = scmp.ne.s32.totalorder %s23, %s26
      %p32 = scmp.eq.s32.totalorder %s13, 0
      %p33 = por %p31, %p32
      %p34 = scmp.ne.s32.totalorder %s23, %s26
      %p35 = scmp.eq.s32.totalorder %s18, 1
      %p36 = por %p34, %p35
      %p37 = scmp.ne.s32.totalorder %s26, %s27
      %p38 = scmp.eq.s32.totalorder %s18, 0
      %p39 = por %p37, %p38
      %p40 = scmp.ne.s32.totalorder %s26, %s27
      %p41 = scmp.eq.s32.totalorder %s19, 1
      %p42 = por %p40, %p41
      %p44 = scmp.ne.s32.totalorder %s27, %s43
      %p45 = scmp.eq.s32.totalorder %s19, 0
      %p46 = por %p44, %p45
      %s48 = sadd.s32 %s47, 1
      %p51 = scmp.eq.s32.totalorder %s13, 1
      %p52 = scmp.ne.s32.totalorder %s47, %s49
      %p53 = scmp.eq.s32.totalorder %s13, 0
      %p54 = por %p52, %p53
      %p55 = scmp.ne.s32.totalorder %s47, %s49
      %p56 = scmp.eq.s32.totalorder %s18, 1
      %p57 = por %p55, %p56
      %p58 = scmp.ne.s32.totalorder %s49, %s50
      %p59 = scmp.eq.s32.totalorder %s18, 0
      %p60 = por %p58, %p59
      %p61 = scmp.ne.s32.totalorder %s49, %s50
      %p62 = scmp.eq.s32.totalorder %s19, 1
      %p63 = por %p61, %p62
      %p65 = scmp.ne.s32.totalorder %s50, %s64
      %p66 = scmp.eq.s32.totalorder %s19, 0
      %p67 = por %p65, %p66
      %s69 = sadd.s32 %s68, 1
      %p72 = scmp.eq.s32.totalorder %s13, 1
      %p73 = scmp.ne.s32.totalorder %s68, %s70
      %p74 = scmp.eq.s32.totalorder %s13, 0
      %p75 = por %p73, %p74
      %p76 = scmp.ne.s32.totalorder %s68, %s70
      %p77 = scmp.eq.s32.totalorder %s18, 1
      %p78 = por %p76, %p77
      %p79 = scmp.ne.s32.totalorder %s70, %s71
      %p80 = scmp.eq.s32.totalorder %s18, 0
      %p81 = por %p79, %p80
      %p82 = scmp.ne.s32.totalorder %s70, %s71
      %p83 = scmp.eq.s32.totalorder %s19, 1
      %p84 = por %p82, %p83
      %p86 = scmp.ne.s32.totalorder %s71, %s85
      %p87 = scmp.eq.s32.totalorder %s19, 0
      %p88 = por %p86, %p87
      %s90 = sadd.s32 %s89, 1
      %p93 = scmp.eq.s32.totalorder %s13, 1
      %p94 = scmp.ne.s32.totalorder %s89, %s91
      %p95 = scmp.eq.s32.totalorder %s13, 0
      %p96 = por %p94, %p95
      %p97 = scmp.ne.s32.totalorder %s89, %s91
      %p98 = scmp.eq.s32.totalorder %s18, 1
      %p99 = por %p97, %p98
      %p100 = scmp.ne.s32.totalorder %s91, %s92
      %p101 = scmp.eq.s32.totalorder %s18, 0
      %p102 = por %p100, %p101
      %p103 = scmp.ne.s32.totalorder %s91, %s92
      %p104 = scmp.eq.s32.totalorder %s19, 1
      %p105 = por %p103, %p104
      %p107 = scmp.ne.s32.totalorder %s92, %s106
      %p108 = scmp.eq.s32.totalorder %s19, 0
      %p109 = por %p107, %p108
      %s110 = ssub.s32 %s13, %s20
      %p111 = scmp.eq.s32.totalorder %s110, 0
      %s113 = sadd.s32 %s112, 1
      %s114 = scalar_select %p111, %s112, %s113
      %p117 = pneg %p111
      %p118 = scmp.eq.s32.totalorder %s13, 1
      %p119 = por %p117, %p118
      %p120 = scmp.ne.s32.totalorder %s112, %s115
      %p121 = scmp.eq.s32.totalorder %s13, 0
      %p122 = por %p120, %p121
      %p123 = scmp.ne.s32.totalorder %s112, %s115
      %p124 = scmp.eq.s32.totalorder %s18, 1
      %p125 = por %p123, %p124
      %p126 = scmp.ne.s32.totalorder %s115, %s116
      %p127 = scmp.eq.s32.totalorder %s18, 0
      %p128 = por %p126, %p127
      %p129 = scmp.ne.s32.totalorder %s115, %s116
      %p130 = scmp.eq.s32.totalorder %s19, 1
      %p131 = por %p129, %p130
      %p133 = scmp.ne.s32.totalorder %s116, %s132
      %p134 = scmp.eq.s32.totalorder %s19, 0
      %p135 = por %p133, %p134
      %p136 = scmp.le.s32.totalorder 1, %s13
      %p137 = scmp.lt.s32.totalorder %s13, 3
      %p138 = pnand %p136, %p137
      %p139 = pneg %p138
      // Predicated region
      $region9: #{tpu_custom_call.1} parent=5 // pred_check
        _
      $region10: #{tpu_custom_call.1} parent=5 // pred_check_branch
        %141 = sbr.rel (%p138) target = $region12
      $region11: #{tpu_custom_call.1} parent=5 // pred_region
        %s142 = ssub.s32 %s13, 1
        // Predicated region
        $region13: #{tpu_custom_call.1} parent=11 // pred_check
          %p143 = pneg %p60
        $region14: #{tpu_custom_call.1} parent=11 // pred_check_branch
          %145 = sbr.rel (%p143) target = $region16
        $region15: #{tpu_custom_call.1} parent=11 // pred_region
          _
        $region16: #{tpu_custom_call.1} parent=11 // pred_fallthru
          _
        // Predicated region
        $region17: #{tpu_custom_call.1} parent=11 // pred_check
          %p146 = pneg %p81
        $region18: #{tpu_custom_call.1} parent=11 // pred_check_branch
          %148 = sbr.rel (%p146) target = $region20
        $region19: #{tpu_custom_call.1} parent=11 // pred_region
          _
        $region20: #{tpu_custom_call.1} parent=11 // pred_fallthru
          _
        // Predicated region
        $region21: #{tpu_custom_call.1} parent=11 // pred_check
          %p149 = pneg %p102
        $region22: #{tpu_custom_call.1} parent=11 // pred_check_branch
          %151 = sbr.rel (%p149) target = $region24
        $region23: #{tpu_custom_call.1} parent=11 // pred_region
          _
        $region24: #{tpu_custom_call.1} parent=11 // pred_fallthru
          _
      $region12: #{tpu_custom_call.1} parent=5 // pred_fallthru
        _
      %p152 = scmp.lt.s32.totalorder %s13, 2
      // Predicated region
      $region25: #{tpu_custom_call.1} parent=5 // pred_check
        %p153 = pneg %p152
      $region26: #{tpu_custom_call.1} parent=5 // pred_check_branch
        %155 = sbr.rel (%p153) target = $region28
      $region27: #{tpu_custom_call.1} parent=5 // pred_region
        // Predicated region
        $region29: #{tpu_custom_call.1} parent=27 // pred_check
          %p156 = pneg %p33
        $region30: #{tpu_custom_call.1} parent=27 // pred_check_branch
          %158 = sbr.rel (%p156) target = $region32
        $region31: #{tpu_custom_call.1} parent=27 // pred_region
          %p159 = scmp.lt.s32.totalorder %s13, 1
          %s160 = scalar_select %p159, %s13, 1
          %s161 = smul.addr %s160, 54
          %s162 = smul.addr %s161, 8
          %s163 = scalar_lea.vmem %s0, %s162
        $region32: #{tpu_custom_call.1} parent=27 // pred_fallthru
          _
      $region28: #{tpu_custom_call.1} parent=5 // pred_fallthru
        _
      %p164 = scmp.le.s32.totalorder 1, %s13
      %p165 = scmp.lt.s32.totalorder %s13, 3
      %p166 = pnand %p164, %p165
      %p167 = pneg %p166
      // Predicated region
      $region33: #{tpu_custom_call.1} parent=5 // pred_check
        _
      $region34: #{tpu_custom_call.1} parent=5 // pred_check_branch
        %169 = sbr.rel (%p166) target = $region36
      $region35: #{tpu_custom_call.1} parent=5 // pred_region
        %s170 = ssub.s32 %s13, 1
        %p171 = scmp.lt.s32.totalorder %s18, 1
        %s172 = scalar_select %p171, %s18, 1
        %s173 = smul.addr %s172, 54
        %s174 = smul.addr %s173, 8
        %s175 = scalar_lea.vmem %s0, %s174
        %p176 = pneg %p39
        %p177 = pneg %p36
        %p178 = pneg %p60
        %p179 = pneg %p57
        %p180 = pneg %p81
        %p181 = pneg %p78
        %p182 = pneg %p102
        %p183 = pneg %p99
        %p184 = pneg %p128
        %p185 = pneg %p125
        %s186 = sand.u32 %s115, 1
        %s187 = scalar_lea.sflag [#allocation3], %s186
        %s188 = sand.u32 %s115, 1
        %s189 = smul.addr %s188, 256
        %s190 = scalar_lea.vmem [#allocation2], %s189
        %p191 = scmp.lt.s32.totalorder %s18, 1
        %s192 = scalar_select %p191, %s18, 1
        %s193 = smul.addr %s192, 54
        %s194 = smul.addr %s193, 8
        %s195 = scalar_lea.vmem %s0, %s194
        %v196 = vld [vmem:[%s195] sm:$0xff]
        %v197 = vld [vmem:[%s195 + $0x8] sm:$0xff]
        %v198 = vld [vmem:[%s195 + $0x18] sm:$0xff]
        %v199 = vld [vmem:[%s195 + $0x20] sm:$0xff]
        %v200 = vld [vmem:[%s195 + $0x30] sm:$0xff]
        %v201 = vld [vmem:[%s195 + $0x38] sm:$0xff]
        %v202 = vld [vmem:[%s195 + $0x48] sm:$0xff]
        %v203 = vld [vmem:[%s195 + $0x50] sm:$0xff]
        %v204 = vld [vmem:[%s195 + $0x60] sm:$0xff]
        %v205 = vld [vmem:[%s195 + $0x68] sm:$0xff]
        %v206 = vld [vmem:[%s195 + $0x78] sm:$0xff]
        %v207 = vld [vmem:[%s195 + $0x80] sm:$0xff]
        %v208 = vld [vmem:[%s195 + $0x90] sm:$0xff]
        %v209 = vld [vmem:[%s195 + $0x98] sm:$0xff]
        %v210 = vld [vmem:[%s195 + $0xa8] sm:$0xff]
        %v211 = vld [vmem:[%s195 + $0xb0] sm:$0xff]
        %v212 = vld [vmem:[%s195 + $0xc0] sm:$0xff]
        %v213 = vld [vmem:[%s195 + $0xc8] sm:$0xff]
        %v214 = vld [vmem:[%s195 + $0xd8] sm:$0xff]
        %v215 = vld [vmem:[%s195 + $0xe0] sm:$0xff]
        %v216 = vld [vmem:[%s195 + $0xf0] sm:$0xff]
        %v217 = vld [vmem:[%s195 + $0xf8] sm:$0xff]
        %v218 = vld [vmem:[%s195 + $0x108] sm:$0xff]
        %v219 = vld [vmem:[%s195 + $0x110] sm:$0xff]
        %v220 = vld [vmem:[%s195 + $0x120] sm:$0xff]
        %v221 = vld [vmem:[%s195 + $0x128] sm:$0xff]
        %v222 = vld [vmem:[%s195 + $0x138] sm:$0xff]
        %v223 = vld [vmem:[%s195 + $0x140] sm:$0xff]
        %v224 = vld [vmem:[%s195 + $0x150] sm:$0xff]
        %v225 = vld [vmem:[%s195 + $0x158] sm:$0xff]
        %v226 = vld [vmem:[%s195 + $0x168] sm:$0xff]
        %v227 = vld [vmem:[%s195 + $0x170] sm:$0xff]
        %v228 = vld [vmem:[%s1] sm:$0x1]
        %230 = vset.pattern.permute.xlu0 0
        %231 = vperm.xlu0 %230, %v196
        %v232 = vpop.permute.xlu0 %231
        %235 = vset.pattern.permute.xlu0 0
        %236 = vperm.xlu0 %235, %v197
        %v237 = vpop.permute.xlu0 %236
        %240 = vset.pattern.permute.xlu0 0
        %241 = vperm.xlu0 %240, %v198
        %v242 = vpop.permute.xlu0 %241
        %245 = vset.pattern.permute.xlu0 0
        %246 = vperm.xlu0 %245, %v199
        %v247 = vpop.permute.xlu0 %246
        %250 = vset.pattern.permute.xlu0 0
        %251 = vperm.xlu0 %250, %v200
        %v252 = vpop.permute.xlu0 %251
        %255 = vset.pattern.permute.xlu0 0
        %256 = vperm.xlu0 %255, %v201
        %v257 = vpop.permute.xlu0 %256
        %260 = vset.pattern.permute.xlu0 0
        %261 = vperm.xlu0 %260, %v202
        %v262 = vpop.permute.xlu0 %261
        %265 = vset.pattern.permute.xlu0 0
        %266 = vperm.xlu0 %265, %v203
        %v267 = vpop.permute.xlu0 %266
        %270 = vset.pattern.permute.xlu0 0
        %271 = vperm.xlu0 %270, %v204
        %v272 = vpop.permute.xlu0 %271
        %275 = vset.pattern.permute.xlu0 0
        %276 = vperm.xlu0 %275, %v205
        %v277 = vpop.permute.xlu0 %276
        %280 = vset.pattern.permute.xlu0 0
        %281 = vperm.xlu0 %280, %v206
        %v282 = vpop.permute.xlu0 %281
        %285 = vset.pattern.permute.xlu0 0
        %286 = vperm.xlu0 %285, %v207
        %v287 = vpop.permute.xlu0 %286
        %290 = vset.pattern.permute.xlu0 0
        %291 = vperm.xlu0 %290, %v208
        %v292 = vpop.permute.xlu0 %291
        %295 = vset.pattern.permute.xlu0 0
        %296 = vperm.xlu0 %295, %v209
        %v297 = vpop.permute.xlu0 %296
        %300 = vset.pattern.permute.xlu0 0
        %301 = vperm.xlu0 %300, %v210
        %v302 = vpop.permute.xlu0 %301
        %305 = vset.pattern.permute.xlu0 0
        %306 = vperm.xlu0 %305, %v211
        %v307 = vpop.permute.xlu0 %306
        %310 = vset.pattern.permute.xlu0 0
        %311 = vperm.xlu0 %310, %v212
        %v312 = vpop.permute.xlu0 %311
        %315 = vset.pattern.permute.xlu0 0
        %316 = vperm.xlu0 %315, %v213
        %v317 = vpop.permute.xlu0 %316
        %320 = vset.pattern.permute.xlu0 0
        %321 = vperm.xlu0 %320, %v214
        %v322 = vpop.permute.xlu0 %321
        %325 = vset.pattern.permute.xlu0 0
        %326 = vperm.xlu0 %325, %v215
        %v327 = vpop.permute.xlu0 %326
        %330 = vset.pattern.permute.xlu0 0
        %331 = vperm.xlu0 %330, %v216
        %v332 = vpop.permute.xlu0 %331
        %335 = vset.pattern.permute.xlu0 0
        %336 = vperm.xlu0 %335, %v217
        %v337 = vpop.permute.xlu0 %336
        %340 = vset.pattern.permute.xlu0 0
        %341 = vperm.xlu0 %340, %v218
        %v342 = vpop.permute.xlu0 %341
        %345 = vset.pattern.permute.xlu0 0
        %346 = vperm.xlu0 %345, %v219
        %v347 = vpop.permute.xlu0 %346
        %350 = vset.pattern.permute.xlu0 0
        %351 = vperm.xlu0 %350, %v220
        %v352 = vpop.permute.xlu0 %351
        %355 = vset.pattern.permute.xlu0 0
        %356 = vperm.xlu0 %355, %v221
        %v357 = vpop.permute.xlu0 %356
        %360 = vset.pattern.permute.xlu0 0
        %361 = vperm.xlu0 %360, %v222
        %v362 = vpop.permute.xlu0 %361
        %365 = vset.pattern.permute.xlu0 0
        %366 = vperm.xlu0 %365, %v223
        %v367 = vpop.permute.xlu0 %366
        %370 = vset.pattern.permute.xlu0 0
        %371 = vperm.xlu0 %370, %v224
        %v372 = vpop.permute.xlu0 %371
        %375 = vset.pattern.permute.xlu0 0
        %376 = vperm.xlu0 %375, %v225
        %v377 = vpop.permute.xlu0 %376
        %380 = vset.pattern.permute.xlu0 0
        %381 = vperm.xlu0 %380, %v226
        %v382 = vpop.permute.xlu0 %381
        %385 = vset.pattern.permute.xlu0 0
        %386 = vperm.xlu0 %385, %v227
        %v387 = vpop.permute.xlu0 %386
        %v390 = vlaneseq
        %v391 = vshrl.u32 %v390, 7
        %v392 = vsub.s32 0, %v391
        %v393 = vrot.slane %v228, %v392
        %v395 = vmul.f32 %v232, %v393
        %v396 = vmul.f32 %v237, %v393
        %v397 = vmul.f32 %v242, %v393
        %v398 = vmul.f32 %v247, %v393
        %v399 = vmul.f32 %v252, %v393
        %v400 = vmul.f32 %v257, %v393
        %v401 = vmul.f32 %v262, %v393
        %v402 = vmul.f32 %v267, %v393
        %v403 = vmul.f32 %v272, %v393
        %v404 = vmul.f32 %v277, %v393
        %v405 = vmul.f32 %v282, %v393
        %v406 = vmul.f32 %v287, %v393
        %v407 = vmul.f32 %v292, %v393
        %v408 = vmul.f32 %v297, %v393
        %v409 = vmul.f32 %v302, %v393
        %v410 = vmul.f32 %v307, %v393
        %v411 = vmul.f32 %v312, %v393
        %v412 = vmul.f32 %v317, %v393
        %v413 = vmul.f32 %v322, %v393
        %v414 = vmul.f32 %v327, %v393
        %v415 = vmul.f32 %v332, %v393
        %v416 = vmul.f32 %v337, %v393
        %v417 = vmul.f32 %v342, %v393
        %v418 = vmul.f32 %v347, %v393
        %v419 = vmul.f32 %v352, %v393
        %v420 = vmul.f32 %v357, %v393
        %v421 = vmul.f32 %v362, %v393
        %v422 = vmul.f32 %v367, %v393
        %v423 = vmul.f32 %v372, %v393
        %v424 = vmul.f32 %v377, %v393
        %v425 = vmul.f32 %v382, %v393
        %v426 = vmul.f32 %v387, %v393
        %v427 = vadd.f32 %v395, 0.0
        %v428 = vadd.f32 %v396, 0.0
        %v429 = vadd.f32 %v397, 0.0
        %v430 = vadd.f32 %v398, 0.0
        %v431 = vadd.f32 %v399, 0.0
        %v432 = vadd.f32 %v400, 0.0
        %v433 = vadd.f32 %v401, 0.0
        %v434 = vadd.f32 %v402, 0.0
        %v435 = vadd.f32 %v403, 0.0
        %v436 = vadd.f32 %v404, 0.0
        %v437 = vadd.f32 %v405, 0.0
        %v438 = vadd.f32 %v406, 0.0
        %v439 = vadd.f32 %v407, 0.0
        %v440 = vadd.f32 %v408, 0.0
        %v441 = vadd.f32 %v409, 0.0
        %v442 = vadd.f32 %v410, 0.0
        %v443 = vadd.f32 %v411, 0.0
        %v444 = vadd.f32 %v412, 0.0
        %v445 = vadd.f32 %v413, 0.0
        %v446 = vadd.f32 %v414, 0.0
        %v447 = vadd.f32 %v415, 0.0
        %v448 = vadd.f32 %v416, 0.0
        %v449 = vadd.f32 %v417, 0.0
        %v450 = vadd.f32 %v418, 0.0
        %v451 = vadd.f32 %v419, 0.0
        %v452 = vadd.f32 %v420, 0.0
        %v453 = vadd.f32 %v421, 0.0
        %v454 = vadd.f32 %v422, 0.0
        %v455 = vadd.f32 %v423, 0.0
        %v456 = vadd.f32 %v424, 0.0
        %v457 = vadd.f32 %v425, 0.0
        %v458 = vadd.f32 %v426, 0.0
        %v459 = vld [vmem:[%s195 + $0x1] sm:$0xff]
        %v460 = vld [vmem:[%s195 + $0x9] sm:$0xff]
        %v461 = vld [vmem:[%s195 + $0x19] sm:$0xff]
        %v462 = vld [vmem:[%s195 + $0x21] sm:$0xff]
        %v463 = vld [vmem:[%s195 + $0x31] sm:$0xff]
        %v464 = vld [vmem:[%s195 + $0x39] sm:$0xff]
        %v465 = vld [vmem:[%s195 + $0x49] sm:$0xff]
        %v466 = vld [vmem:[%s195 + $0x51] sm:$0xff]
        %v467 = vld [vmem:[%s195 + $0x61] sm:$0xff]
        %v468 = vld [vmem:[%s195 + $0x69] sm:$0xff]
        %v469 = vld [vmem:[%s195 + $0x79] sm:$0xff]
        %v470 = vld [vmem:[%s195 + $0x81] sm:$0xff]
        %v471 = vld [vmem:[%s195 + $0x91] sm:$0xff]
        %v472 = vld [vmem:[%s195 + $0x99] sm:$0xff]
        %v473 = vld [vmem:[%s195 + $0xa9] sm:$0xff]
        %v474 = vld [vmem:[%s195 + $0xb1] sm:$0xff]
        %v475 = vld [vmem:[%s195 + $0xc1] sm:$0xff]
        %v476 = vld [vmem:[%s195 + $0xc9] sm:$0xff]
        %v477 = vld [vmem:[%s195 + $0xd9] sm:$0xff]
        %v478 = vld [vmem:[%s195 + $0xe1] sm:$0xff]
        %v479 = vld [vmem:[%s195 + $0xf1] sm:$0xff]
        %v480 = vld [vmem:[%s195 + $0xf9] sm:$0xff]
        %v481 = vld [vmem:[%s195 + $0x109] sm:$0xff]
        %v482 = vld [vmem:[%s195 + $0x111] sm:$0xff]
        %v483 = vld [vmem:[%s195 + $0x121] sm:$0xff]
        %v484 = vld [vmem:[%s195 + $0x129] sm:$0xff]
        %v485 = vld [vmem:[%s195 + $0x139] sm:$0xff]
        %v486 = vld [vmem:[%s195 + $0x141] sm:$0xff]
        %v487 = vld [vmem:[%s195 + $0x151] sm:$0xff]
        %v488 = vld [vmem:[%s195 + $0x159] sm:$0xff]
        %v489 = vld [vmem:[%s195 + $0x169] sm:$0xff]
        %v490 = vld [vmem:[%s195 + $0x171] sm:$0xff]
        %s491 = scalar_lea.vmem %s1, 1
        %v492 = vld [vmem:[%s491] sm:$0x1]
        %494 = vset.pattern.permute.xlu0 0
        %495 = vperm.xlu0 %494, %v459
        %v496 = vpop.permute.xlu0 %495
        %499 = vset.pattern.permute.xlu0 0
        %500 = vperm.xlu0 %499, %v460
        %v501 = vpop.permute.xlu0 %500
        %504 = vset.pattern.permute.xlu0 0
        %505 = vperm.xlu0 %504, %v461
        %v506 = vpop.permute.xlu0 %505
        %509 = vset.pattern.permute.xlu0 0
        %510 = vperm.xlu0 %509, %v462
        %v511 = vpop.permute.xlu0 %510
        %514 = vset.pattern.permute.xlu0 0
        %515 = vperm.xlu0 %514, %v463
        %v516 = vpop.permute.xlu0 %515
        %519 = vset.pattern.permute.xlu0 0
        %520 = vperm.xlu0 %519, %v464
        %v521 = vpop.permute.xlu0 %520
        %524 = vset.pattern.permute.xlu0 0
        %525 = vperm.xlu0 %524, %v465
        %v526 = vpop.permute.xlu0 %525
        %529 = vset.pattern.permute.xlu0 0
        %530 = vperm.xlu0 %529, %v466
        %v531 = vpop.permute.xlu0 %530
        %534 = vset.pattern.permute.xlu0 0
        %535 = vperm.xlu0 %534, %v467
        %v536 = vpop.permute.xlu0 %535
        %539 = vset.pattern.permute.xlu0 0
        %540 = vperm.xlu0 %539, %v468
        %v541 = vpop.permute.xlu0 %540
        %544 = vset.pattern.permute.xlu0 0
        %545 = vperm.xlu0 %544, %v469
        %v546 = vpop.permute.xlu0 %545
        %549 = vset.pattern.permute.xlu0 0
        %550 = vperm.xlu0 %549, %v470
        %v551 = vpop.permute.xlu0 %550
        %554 = vset.pattern.permute.xlu0 0
        %555 = vperm.xlu0 %554, %v471
        %v556 = vpop.permute.xlu0 %555
        %559 = vset.pattern.permute.xlu0 0
        %560 = vperm.xlu0 %559, %v472
        %v561 = vpop.permute.xlu0 %560
        %564 = vset.pattern.permute.xlu0 0
        %565 = vperm.xlu0 %564, %v473
        %v566 = vpop.permute.xlu0 %565
        %569 = vset.pattern.permute.xlu0 0
        %570 = vperm.xlu0 %569, %v474
        %v571 = vpop.permute.xlu0 %570
        %574 = vset.pattern.permute.xlu0 0
        %575 = vperm.xlu0 %574, %v475
        %v576 = vpop.permute.xlu0 %575
        %579 = vset.pattern.permute.xlu0 0
        %580 = vperm.xlu0 %579, %v476
        %v581 = vpop.permute.xlu0 %580
        %584 = vset.pattern.permute.xlu0 0
        %585 = vperm.xlu0 %584, %v477
        %v586 = vpop.permute.xlu0 %585
        %589 = vset.pattern.permute.xlu0 0
        %590 = vperm.xlu0 %589, %v478
        %v591 = vpop.permute.xlu0 %590
        %594 = vset.pattern.permute.xlu0 0
        %595 = vperm.xlu0 %594, %v479
        %v596 = vpop.permute.xlu0 %595
        %599 = vset.pattern.permute.xlu0 0
        %600 = vperm.xlu0 %599, %v480
        %v601 = vpop.permute.xlu0 %600
        %604 = vset.pattern.permute.xlu0 0
        %605 = vperm.xlu0 %604, %v481
        %v606 = vpop.permute.xlu0 %605
        %609 = vset.pattern.permute.xlu0 0
        %610 = vperm.xlu0 %609, %v482
        %v611 = vpop.permute.xlu0 %610
        %614 = vset.pattern.permute.xlu0 0
        %615 = vperm.xlu0 %614, %v483
        %v616 = vpop.permute.xlu0 %615
        %619 = vset.pattern.permute.xlu0 0
        %620 = vperm.xlu0 %619, %v484
        %v621 = vpop.permute.xlu0 %620
        %624 = vset.pattern.permute.xlu0 0
        %625 = vperm.xlu0 %624, %v485
        %v626 = vpop.permute.xlu0 %625
        %629 = vset.pattern.permute.xlu0 0
        %630 = vperm.xlu0 %629, %v486
        %v631 = vpop.permute.xlu0 %630
        %634 = vset.pattern.permute.xlu0 0
        %635 = vperm.xlu0 %634, %v487
        %v636 = vpop.permute.xlu0 %635
        %639 = vset.pattern.permute.xlu0 0
        %640 = vperm.xlu0 %639, %v488
        %v641 = vpop.permute.xlu0 %640
        %644 = vset.pattern.permute.xlu0 0
        %645 = vperm.xlu0 %644, %v489
        %v646 = vpop.permute.xlu0 %645
        %649 = vset.pattern.permute.xlu0 0
        %650 = vperm.xlu0 %649, %v490
        %v651 = vpop.permute.xlu0 %650
        %v654 = vlaneseq
        %v655 = vshrl.u32 %v654, 7
        %v656 = vsub.s32 0, %v655
        %v657 = vrot.slane %v492, %v656
        %v659 = vmul.f32 %v496, %v657
        %v660 = vmul.f32 %v501, %v657
        %v661 = vmul.f32 %v506, %v657
        %v662 = vmul.f32 %v511, %v657
        %v663 = vmul.f32 %v516, %v657
        %v664 = vmul.f32 %v521, %v657
        %v665 = vmul.f32 %v526, %v657
        %v666 = vmul.f32 %v531, %v657
        %v667 = vmul.f32 %v536, %v657
        %v668 = vmul.f32 %v541, %v657
        %v669 = vmul.f32 %v546, %v657
        %v670 = vmul.f32 %v551, %v657
        %v671 = vmul.f32 %v556, %v657
        %v672 = vmul.f32 %v561, %v657
        %v673 = vmul.f32 %v566, %v657
        %v674 = vmul.f32 %v571, %v657
        %v675 = vmul.f32 %v576, %v657
        %v676 = vmul.f32 %v581, %v657
        %v677 = vmul.f32 %v586, %v657
        %v678 = vmul.f32 %v591, %v657
        %v679 = vmul.f32 %v596, %v657
        %v680 = vmul.f32 %v601, %v657
        %v681 = vmul.f32 %v606, %v657
        %v682 = vmul.f32 %v611, %v657
        %v683 = vmul.f32 %v616, %v657
        %v684 = vmul.f32 %v621, %v657
        %v685 = vmul.f32 %v626, %v657
        %v686 = vmul.f32 %v631, %v657
        %v687 = vmul.f32 %v636, %v657
        %v688 = vmul.f32 %v641, %v657
        %v689 = vmul.f32 %v646, %v657
        %v690 = vmul.f32 %v651, %v657
        %v691 = vadd.f32 %v427, %v659
        %v692 = vadd.f32 %v428, %v660
        %v693 = vadd.f32 %v429, %v661
        %v694 = vadd.f32 %v430, %v662
        %v695 = vadd.f32 %v431, %v663
        %v696 = vadd.f32 %v432, %v664
        %v697 = vadd.f32 %v433, %v665
        %v698 = vadd.f32 %v434, %v666
        %v699 = vadd.f32 %v435, %v667
        %v700 = vadd.f32 %v436, %v668
        %v701 = vadd.f32 %v437, %v669
        %v702 = vadd.f32 %v438, %v670
        %v703 = vadd.f32 %v439, %v671
        %v704 = vadd.f32 %v440, %v672
        %v705 = vadd.f32 %v441, %v673
        %v706 = vadd.f32 %v442, %v674
        %v707 = vadd.f32 %v443, %v675
        %v708 = vadd.f32 %v444, %v676
        %v709 = vadd.f32 %v445, %v677
        %v710 = vadd.f32 %v446, %v678
        %v711 = vadd.f32 %v447, %v679
        %v712 = vadd.f32 %v448, %v680
        %v713 = vadd.f32 %v449, %v681
        %v714 = vadd.f32 %v450, %v682
        %v715 = vadd.f32 %v451, %v683
        %v716 = vadd.f32 %v452, %v684
        %v717 = vadd.f32 %v453, %v685
        %v718 = vadd.f32 %v454, %v686
        %v719 = vadd.f32 %v455, %v687
        %v720 = vadd.f32 %v456, %v688
        %v721 = vadd.f32 %v457, %v689
        %v722 = vadd.f32 %v458, %v690
        %v723 = vld [vmem:[%s195 + $0x2] sm:$0xff]
        %v724 = vld [vmem:[%s195 + $0xa] sm:$0xff]
        %v725 = vld [vmem:[%s195 + $0x1a] sm:$0xff]
        %v726 = vld [vmem:[%s195 + $0x22] sm:$0xff]
        %v727 = vld [vmem:[%s195 + $0x32] sm:$0xff]
        %v728 = vld [vmem:[%s195 + $0x3a] sm:$0xff]
        %v729 = vld [vmem:[%s195 + $0x4a] sm:$0xff]
        %v730 = vld [vmem:[%s195 + $0x52] sm:$0xff]
        %v731 = vld [vmem:[%s195 + $0x62] sm:$0xff]
        %v732 = vld [vmem:[%s195 + $0x6a] sm:$0xff]
        %v733 = vld [vmem:[%s195 + $0x7a] sm:$0xff]
        %v734 = vld [vmem:[%s195 + $0x82] sm:$0xff]
        %v735 = vld [vmem:[%s195 + $0x92] sm:$0xff]
        %v736 = vld [vmem:[%s195 + $0x9a] sm:$0xff]
        %v737 = vld [vmem:[%s195 + $0xaa] sm:$0xff]
        %v738 = vld [vmem:[%s195 + $0xb2] sm:$0xff]
        %v739 = vld [vmem:[%s195 + $0xc2] sm:$0xff]
        %v740 = vld [vmem:[%s195 + $0xca] sm:$0xff]
        %v741 = vld [vmem:[%s195 + $0xda] sm:$0xff]
        %v742 = vld [vmem:[%s195 + $0xe2] sm:$0xff]
        %v743 = vld [vmem:[%s195 + $0xf2] sm:$0xff]
        %v744 = vld [vmem:[%s195 + $0xfa] sm:$0xff]
        %v745 = vld [vmem:[%s195 + $0x10a] sm:$0xff]
        %v746 = vld [vmem:[%s195 + $0x112] sm:$0xff]
        %v747 = vld [vmem:[%s195 + $0x122] sm:$0xff]
        %v748 = vld [vmem:[%s195 + $0x12a] sm:$0xff]
        %v749 = vld [vmem:[%s195 + $0x13a] sm:$0xff]
        %v750 = vld [vmem:[%s195 + $0x142] sm:$0xff]
        %v751 = vld [vmem:[%s195 + $0x152] sm:$0xff]
        %v752 = vld [vmem:[%s195 + $0x15a] sm:$0xff]
        %v753 = vld [vmem:[%s195 + $0x16a] sm:$0xff]
        %v754 = vld [vmem:[%s195 + $0x172] sm:$0xff]
        %s755 = scalar_lea.vmem %s1, 2
        %v756 = vld [vmem:[%s755] sm:$0x1]
        %758 = vset.pattern.permute.xlu0 0
        %759 = vperm.xlu0 %758, %v723
        %v760 = vpop.permute.xlu0 %759
        %763 = vset.pattern.permute.xlu0 0
        %764 = vperm.xlu0 %763, %v724
        %v765 = vpop.permute.xlu0 %764
        %768 = vset.pattern.permute.xlu0 0
        %769 = vperm.xlu0 %768, %v725
        %v770 = vpop.permute.xlu0 %769
        %773 = vset.pattern.permute.xlu0 0
        %774 = vperm.xlu0 %773, %v726
        %v775 = vpop.permute.xlu0 %774
        %778 = vset.pattern.permute.xlu0 0
        %779 = vperm.xlu0 %778, %v727
        %v780 = vpop.permute.xlu0 %779
        %783 = vset.pattern.permute.xlu0 0
        %784 = vperm.xlu0 %783, %v728
        %v785 = vpop.permute.xlu0 %784
        %788 = vset.pattern.permute.xlu0 0
        %789 = vperm.xlu0 %788, %v729
        %v790 = vpop.permute.xlu0 %789
        %793 = vset.pattern.permute.xlu0 0
        %794 = vperm.xlu0 %793, %v730
        %v795 = vpop.permute.xlu0 %794
        %798 = vset.pattern.permute.xlu0 0
        %799 = vperm.xlu0 %798, %v731
        %v800 = vpop.permute.xlu0 %799
        %803 = vset.pattern.permute.xlu0 0
        %804 = vperm.xlu0 %803, %v732
        %v805 = vpop.permute.xlu0 %804
        %808 = vset.pattern.permute.xlu0 0
        %809 = vperm.xlu0 %808, %v733
        %v810 = vpop.permute.xlu0 %809
        %813 = vset.pattern.permute.xlu0 0
        %814 = vperm.xlu0 %813, %v734
        %v815 = vpop.permute.xlu0 %814
        %818 = vset.pattern.permute.xlu0 0
        %819 = vperm.xlu0 %818, %v735
        %v820 = vpop.permute.xlu0 %819
        %823 = vset.pattern.permute.xlu0 0
        %824 = vperm.xlu0 %823, %v736
        %v825 = vpop.permute.xlu0 %824
        %828 = vset.pattern.permute.xlu0 0
        %829 = vperm.xlu0 %828, %v737
        %v830 = vpop.permute.xlu0 %829
        %833 = vset.pattern.permute.xlu0 0
        %834 = vperm.xlu0 %833, %v738
        %v835 = vpop.permute.xlu0 %834
        %838 = vset.pattern.permute.xlu0 0
        %839 = vperm.xlu0 %838, %v739
        %v840 = vpop.permute.xlu0 %839
        %843 = vset.pattern.permute.xlu0 0
        %844 = vperm.xlu0 %843, %v740
        %v845 = vpop.permute.xlu0 %844
        %848 = vset.pattern.permute.xlu0 0
        %849 = vperm.xlu0 %848, %v741
        %v850 = vpop.permute.xlu0 %849
        %853 = vset.pattern.permute.xlu0 0
        %854 = vperm.xlu0 %853, %v742
        %v855 = vpop.permute.xlu0 %854
        %858 = vset.pattern.permute.xlu0 0
        %859 = vperm.xlu0 %858, %v743
        %v860 = vpop.permute.xlu0 %859
        %863 = vset.pattern.permute.xlu0 0
        %864 = vperm.xlu0 %863, %v744
        %v865 = vpop.permute.xlu0 %864
        %868 = vset.pattern.permute.xlu0 0
        %869 = vperm.xlu0 %868, %v745
        %v870 = vpop.permute.xlu0 %869
        %873 = vset.pattern.permute.xlu0 0
        %874 = vperm.xlu0 %873, %v746
        %v875 = vpop.permute.xlu0 %874
        %878 = vset.pattern.permute.xlu0 0
        %879 = vperm.xlu0 %878, %v747
        %v880 = vpop.permute.xlu0 %879
        %883 = vset.pattern.permute.xlu0 0
        %884 = vperm.xlu0 %883, %v748
        %v885 = vpop.permute.xlu0 %884
        %888 = vset.pattern.permute.xlu0 0
        %889 = vperm.xlu0 %888, %v749
        %v890 = vpop.permute.xlu0 %889
        %893 = vset.pattern.permute.xlu0 0
        %894 = vperm.xlu0 %893, %v750
        %v895 = vpop.permute.xlu0 %894
        %898 = vset.pattern.permute.xlu0 0
        %899 = vperm.xlu0 %898, %v751
        %v900 = vpop.permute.xlu0 %899
        %903 = vset.pattern.permute.xlu0 0
        %904 = vperm.xlu0 %903, %v752
        %v905 = vpop.permute.xlu0 %904
        %908 = vset.pattern.permute.xlu0 0
        %909 = vperm.xlu0 %908, %v753
        %v910 = vpop.permute.xlu0 %909
        %913 = vset.pattern.permute.xlu0 0
        %914 = vperm.xlu0 %913, %v754
        %v915 = vpop.permute.xlu0 %914
        %v918 = vlaneseq
        %v919 = vshrl.u32 %v918, 7
        %v920 = vsub.s32 0, %v919
        %v921 = vrot.slane %v756, %v920
        %v923 = vmul.f32 %v760, %v921
        %v924 = vmul.f32 %v765, %v921
        %v925 = vmul.f32 %v770, %v921
        %v926 = vmul.f32 %v775, %v921
        %v927 = vmul.f32 %v780, %v921
        %v928 = vmul.f32 %v785, %v921
        %v929 = vmul.f32 %v790, %v921
        %v930 = vmul.f32 %v795, %v921
        %v931 = vmul.f32 %v800, %v921
        %v932 = vmul.f32 %v805, %v921
        %v933 = vmul.f32 %v810, %v921
        %v934 = vmul.f32 %v815, %v921
        %v935 = vmul.f32 %v820, %v921
        %v936 = vmul.f32 %v825, %v921
        %v937 = vmul.f32 %v830, %v921
        %v938 = vmul.f32 %v835, %v921
        %v939 = vmul.f32 %v840, %v921
        %v940 = vmul.f32 %v845, %v921
        %v941 = vmul.f32 %v850, %v921
        %v942 = vmul.f32 %v855, %v921
        %v943 = vmul.f32 %v860, %v921
        %v944 = vmul.f32 %v865, %v921
        %v945 = vmul.f32 %v870, %v921
        %v946 = vmul.f32 %v875, %v921
        %v947 = vmul.f32 %v880, %v921
        %v948 = vmul.f32 %v885, %v921
        %v949 = vmul.f32 %v890, %v921
        %v950 = vmul.f32 %v895, %v921
        %v951 = vmul.f32 %v900, %v921
        %v952 = vmul.f32 %v905, %v921
        %v953 = vmul.f32 %v910, %v921
        %v954 = vmul.f32 %v915, %v921
        %v955 = vadd.f32 %v691, %v923
        %v956 = vadd.f32 %v692, %v924
        %v957 = vadd.f32 %v693, %v925
        %v958 = vadd.f32 %v694, %v926
        %v959 = vadd.f32 %v695, %v927
        %v960 = vadd.f32 %v696, %v928
        %v961 = vadd.f32 %v697, %v929
        %v962 = vadd.f32 %v698, %v930
        %v963 = vadd.f32 %v699, %v931
        %v964 = vadd.f32 %v700, %v932
        %v965 = vadd.f32 %v701, %v933
        %v966 = vadd.f32 %v702, %v934
        %v967 = vadd.f32 %v703, %v935
        %v968 = vadd.f32 %v704, %v936
        %v969 = vadd.f32 %v705, %v937
        %v970 = vadd.f32 %v706, %v938
        %v971 = vadd.f32 %v707, %v939
        %v972 = vadd.f32 %v708, %v940
        %v973 = vadd.f32 %v709, %v941
        %v974 = vadd.f32 %v710, %v942
        %v975 = vadd.f32 %v711, %v943
        %v976 = vadd.f32 %v712, %v944
        %v977 = vadd.f32 %v713, %v945
        %v978 = vadd.f32 %v714, %v946
        %v979 = vadd.f32 %v715, %v947
        %v980 = vadd.f32 %v716, %v948
        %v981 = vadd.f32 %v717, %v949
        %v982 = vadd.f32 %v718, %v950
        %v983 = vadd.f32 %v719, %v951
        %v984 = vadd.f32 %v720, %v952
        %v985 = vadd.f32 %v721, %v953
        %v986 = vadd.f32 %v722, %v954
        %s987 = scalar_lea.vmem %s195, 24
        %v988 = vld [vmem:[%s987] sm:$0xff]
        %v989 = vld [vmem:[%s987 + $0x8] sm:$0xff]
        %v990 = vld [vmem:[%s987 + $0x18] sm:$0xff]
        %v991 = vld [vmem:[%s987 + $0x20] sm:$0xff]
        %v992 = vld [vmem:[%s987 + $0x30] sm:$0xff]
        %v993 = vld [vmem:[%s987 + $0x38] sm:$0xff]
        %v994 = vld [vmem:[%s987 + $0x48] sm:$0xff]
        %v995 = vld [vmem:[%s987 + $0x50] sm:$0xff]
        %v996 = vld [vmem:[%s987 + $0x60] sm:$0xff]
        %v997 = vld [vmem:[%s987 + $0x68] sm:$0xff]
        %v998 = vld [vmem:[%s987 + $0x78] sm:$0xff]
        %v999 = vld [vmem:[%s987 + $0x80] sm:$0xff]
        %v1000 = vld [vmem:[%s987 + $0x90] sm:$0xff]
        %v1001 = vld [vmem:[%s987 + $0x98] sm:$0xff]
        %v1002 = vld [vmem:[%s987 + $0xa8] sm:$0xff]
        %v1003 = vld [vmem:[%s987 + $0xb0] sm:$0xff]
        %v1004 = vld [vmem:[%s987 + $0xc0] sm:$0xff]
        %v1005 = vld [vmem:[%s987 + $0xc8] sm:$0xff]
        %v1006 = vld [vmem:[%s987 + $0xd8] sm:$0xff]
        %v1007 = vld [vmem:[%s987 + $0xe0] sm:$0xff]
        %v1008 = vld [vmem:[%s987 + $0xf0] sm:$0xff]
        %v1009 = vld [vmem:[%s987 + $0xf8] sm:$0xff]
        %v1010 = vld [vmem:[%s987 + $0x108] sm:$0xff]
        %v1011 = vld [vmem:[%s987 + $0x110] sm:$0xff]
        %v1012 = vld [vmem:[%s987 + $0x120] sm:$0xff]
        %v1013 = vld [vmem:[%s987 + $0x128] sm:$0xff]
        %v1014 = vld [vmem:[%s987 + $0x138] sm:$0xff]
        %v1015 = vld [vmem:[%s987 + $0x140] sm:$0xff]
        %v1016 = vld [vmem:[%s987 + $0x150] sm:$0xff]
        %v1017 = vld [vmem:[%s987 + $0x158] sm:$0xff]
        %v1018 = vld [vmem:[%s987 + $0x168] sm:$0xff]
        %v1019 = vld [vmem:[%s987 + $0x170] sm:$0xff]
        %s1020 = scalar_lea.vmem %s1, 3
        %v1021 = vld [vmem:[%s1020] sm:$0x1]
        %1023 = vset.pattern.permute.xlu0 0
        %1024 = vperm.xlu0 %1023, %v988
        %v1025 = vpop.permute.xlu0 %1024
        %1028 = vset.pattern.permute.xlu0 0
        %1029 = vperm.xlu0 %1028, %v989
        %v1030 = vpop.permute.xlu0 %1029
        %1033 = vset.pattern.permute.xlu0 0
        %1034 = vperm.xlu0 %1033, %v990
        %v1035 = vpop.permute.xlu0 %1034
        %1038 = vset.pattern.permute.xlu0 0
        %1039 = vperm.xlu0 %1038, %v991
        %v1040 = vpop.permute.xlu0 %1039
        %1043 = vset.pattern.permute.xlu0 0
        %1044 = vperm.xlu0 %1043, %v992
        %v1045 = vpop.permute.xlu0 %1044
        %1048 = vset.pattern.permute.xlu0 0
        %1049 = vperm.xlu0 %1048, %v993
        %v1050 = vpop.permute.xlu0 %1049
        %1053 = vset.pattern.permute.xlu0 0
        %1054 = vperm.xlu0 %1053, %v994
        %v1055 = vpop.permute.xlu0 %1054
        %1058 = vset.pattern.permute.xlu0 0
        %1059 = vperm.xlu0 %1058, %v995
        %v1060 = vpop.permute.xlu0 %1059
        %1063 = vset.pattern.permute.xlu0 0
        %1064 = vperm.xlu0 %1063, %v996
        %v1065 = vpop.permute.xlu0 %1064
        %1068 = vset.pattern.permute.xlu0 0
        %1069 = vperm.xlu0 %1068, %v997
        %v1070 = vpop.permute.xlu0 %1069
        %1073 = vset.pattern.permute.xlu0 0
        %1074 = vperm.xlu0 %1073, %v998
        %v1075 = vpop.permute.xlu0 %1074
        %1078 = vset.pattern.permute.xlu0 0
        %1079 = vperm.xlu0 %1078, %v999
        %v1080 = vpop.permute.xlu0 %1079
        %1083 = vset.pattern.permute.xlu0 0
        %1084 = vperm.xlu0 %1083, %v1000
        %v1085 = vpop.permute.xlu0 %1084
        %1088 = vset.pattern.permute.xlu0 0
        %1089 = vperm.xlu0 %1088, %v1001
        %v1090 = vpop.permute.xlu0 %1089
        %1093 = vset.pattern.permute.xlu0 0
        %1094 = vperm.xlu0 %1093, %v1002
        %v1095 = vpop.permute.xlu0 %1094
        %1098 = vset.pattern.permute.xlu0 0
        %1099 = vperm.xlu0 %1098, %v1003
        %v1100 = vpop.permute.xlu0 %1099
        %1103 = vset.pattern.permute.xlu0 0
        %1104 = vperm.xlu0 %1103, %v1004
        %v1105 = vpop.permute.xlu0 %1104
        %1108 = vset.pattern.permute.xlu0 0
        %1109 = vperm.xlu0 %1108, %v1005
        %v1110 = vpop.permute.xlu0 %1109
        %1113 = vset.pattern.permute.xlu0 0
        %1114 = vperm.xlu0 %1113, %v1006
        %v1115 = vpop.permute.xlu0 %1114
        %1118 = vset.pattern.permute.xlu0 0
        %1119 = vperm.xlu0 %1118, %v1007
        %v1120 = vpop.permute.xlu0 %1119
        %1123 = vset.pattern.permute.xlu0 0
        %1124 = vperm.xlu0 %1123, %v1008
        %v1125 = vpop.permute.xlu0 %1124
        %1128 = vset.pattern.permute.xlu0 0
        %1129 = vperm.xlu0 %1128, %v1009
        %v1130 = vpop.permute.xlu0 %1129
        %1133 = vset.pattern.permute.xlu0 0
        %1134 = vperm.xlu0 %1133, %v1010
        %v1135 = vpop.permute.xlu0 %1134
        %1138 = vset.pattern.permute.xlu0 0
        %1139 = vperm.xlu0 %1138, %v1011
        %v1140 = vpop.permute.xlu0 %1139
        %1143 = vset.pattern.permute.xlu0 0
        %1144 = vperm.xlu0 %1143, %v1012
        %v1145 = vpop.permute.xlu0 %1144
        %1148 = vset.pattern.permute.xlu0 0
        %1149 = vperm.xlu0 %1148, %v1013
        %v1150 = vpop.permute.xlu0 %1149
        %1153 = vset.pattern.permute.xlu0 0
        %1154 = vperm.xlu0 %1153, %v1014
        %v1155 = vpop.permute.xlu0 %1154
        %1158 = vset.pattern.permute.xlu0 0
        %1159 = vperm.xlu0 %1158, %v1015
        %v1160 = vpop.permute.xlu0 %1159
        %1163 = vset.pattern.permute.xlu0 0
        %1164 = vperm.xlu0 %1163, %v1016
        %v1165 = vpop.permute.xlu0 %1164
        %1168 = vset.pattern.permute.xlu0 0
        %1169 = vperm.xlu0 %1168, %v1017
        %v1170 = vpop.permute.xlu0 %1169
        %1173 = vset.pattern.permute.xlu0 0
        %1174 = vperm.xlu0 %1173, %v1018
        %v1175 = vpop.permute.xlu0 %1174
        %1178 = vset.pattern.permute.xlu0 0
        %1179 = vperm.xlu0 %1178, %v1019
        %v1180 = vpop.permute.xlu0 %1179
        %v1183 = vlaneseq
        %v1184 = vshrl.u32 %v1183, 7
        %v1185 = vsub.s32 0, %v1184
        %v1186 = vrot.slane %v1021, %v1185
        %v1188 = vmul.f32 %v1025, %v1186
        %v1189 = vmul.f32 %v1030, %v1186
        %v1190 = vmul.f32 %v1035, %v1186
        %v1191 = vmul.f32 %v1040, %v1186
        %v1192 = vmul.f32 %v1045, %v1186
        %v1193 = vmul.f32 %v1050, %v1186
        %v1194 = vmul.f32 %v1055, %v1186
        %v1195 = vmul.f32 %v1060, %v1186
        %v1196 = vmul.f32 %v1065, %v1186
        %v1197 = vmul.f32 %v1070, %v1186
        %v1198 = vmul.f32 %v1075, %v1186
        %v1199 = vmul.f32 %v1080, %v1186
        %v1200 = vmul.f32 %v1085, %v1186
        %v1201 = vmul.f32 %v1090, %v1186
        %v1202 = vmul.f32 %v1095, %v1186
        %v1203 = vmul.f32 %v1100, %v1186
        %v1204 = vmul.f32 %v1105, %v1186
        %v1205 = vmul.f32 %v1110, %v1186
        %v1206 = vmul.f32 %v1115, %v1186
        %v1207 = vmul.f32 %v1120, %v1186
        %v1208 = vmul.f32 %v1125, %v1186
        %v1209 = vmul.f32 %v1130, %v1186
        %v1210 = vmul.f32 %v1135, %v1186
        %v1211 = vmul.f32 %v1140, %v1186
        %v1212 = vmul.f32 %v1145, %v1186
        %v1213 = vmul.f32 %v1150, %v1186
        %v1214 = vmul.f32 %v1155, %v1186
        %v1215 = vmul.f32 %v1160, %v1186
        %v1216 = vmul.f32 %v1165, %v1186
        %v1217 = vmul.f32 %v1170, %v1186
        %v1218 = vmul.f32 %v1175, %v1186
        %v1219 = vmul.f32 %v1180, %v1186
        %v1220 = vadd.f32 %v955, %v1188
        %v1221 = vadd.f32 %v956, %v1189
        %v1222 = vadd.f32 %v957, %v1190
        %v1223 = vadd.f32 %v958, %v1191
        %v1224 = vadd.f32 %v959, %v1192
        %v1225 = vadd.f32 %v960, %v1193
        %v1226 = vadd.f32 %v961, %v1194
        %v1227 = vadd.f32 %v962, %v1195
        %v1228 = vadd.f32 %v963, %v1196
        %v1229 = vadd.f32 %v964, %v1197
        %v1230 = vadd.f32 %v965, %v1198
        %v1231 = vadd.f32 %v966, %v1199
        %v1232 = vadd.f32 %v967, %v1200
        %v1233 = vadd.f32 %v968, %v1201
        %v1234 = vadd.f32 %v969, %v1202
        %v1235 = vadd.f32 %v970, %v1203
        %v1236 = vadd.f32 %v971, %v1204
        %v1237 = vadd.f32 %v972, %v1205
        %v1238 = vadd.f32 %v973, %v1206
        %v1239 = vadd.f32 %v974, %v1207
        %v1240 = vadd.f32 %v975, %v1208
        %v1241 = vadd.f32 %v976, %v1209
        %v1242 = vadd.f32 %v977, %v1210
        %v1243 = vadd.f32 %v978, %v1211
        %v1244 = vadd.f32 %v979, %v1212
        %v1245 = vadd.f32 %v980, %v1213
        %v1246 = vadd.f32 %v981, %v1214
        %v1247 = vadd.f32 %v982, %v1215
        %v1248 = vadd.f32 %v983, %v1216
        %v1249 = vadd.f32 %v984, %v1217
        %v1250 = vadd.f32 %v985, %v1218
        %v1251 = vadd.f32 %v986, %v1219
        %v1252 = vld [vmem:[%s987 + $0x1] sm:$0xff]
        %v1253 = vld [vmem:[%s987 + $0x9] sm:$0xff]
        %v1254 = vld [vmem:[%s987 + $0x19] sm:$0xff]
        %v1255 = vld [vmem:[%s987 + $0x21] sm:$0xff]
        %v1256 = vld [vmem:[%s987 + $0x31] sm:$0xff]
        %v1257 = vld [vmem:[%s987 + $0x39] sm:$0xff]
        %v1258 = vld [vmem:[%s987 + $0x49] sm:$0xff]
        %v1259 = vld [vmem:[%s987 + $0x51] sm:$0xff]
        %v1260 = vld [vmem:[%s987 + $0x61] sm:$0xff]
        %v1261 = vld [vmem:[%s987 + $0x69] sm:$0xff]
        %v1262 = vld [vmem:[%s987 + $0x79] sm:$0xff]
        %v1263 = vld [vmem:[%s987 + $0x81] sm:$0xff]
        %v1264 = vld [vmem:[%s987 + $0x91] sm:$0xff]
        %v1265 = vld [vmem:[%s987 + $0x99] sm:$0xff]
        %v1266 = vld [vmem:[%s987 + $0xa9] sm:$0xff]
        %v1267 = vld [vmem:[%s987 + $0xb1] sm:$0xff]
        %v1268 = vld [vmem:[%s987 + $0xc1] sm:$0xff]
        %v1269 = vld [vmem:[%s987 + $0xc9] sm:$0xff]
        %v1270 = vld [vmem:[%s987 + $0xd9] sm:$0xff]
        %v1271 = vld [vmem:[%s987 + $0xe1] sm:$0xff]
        %v1272 = vld [vmem:[%s987 + $0xf1] sm:$0xff]
        %v1273 = vld [vmem:[%s987 + $0xf9] sm:$0xff]
        %v1274 = vld [vmem:[%s987 + $0x109] sm:$0xff]
        %v1275 = vld [vmem:[%s987 + $0x111] sm:$0xff]
        %v1276 = vld [vmem:[%s987 + $0x121] sm:$0xff]
        %v1277 = vld [vmem:[%s987 + $0x129] sm:$0xff]
        %v1278 = vld [vmem:[%s987 + $0x139] sm:$0xff]
        %v1279 = vld [vmem:[%s987 + $0x141] sm:$0xff]
        %v1280 = vld [vmem:[%s987 + $0x151] sm:$0xff]
        %v1281 = vld [vmem:[%s987 + $0x159] sm:$0xff]
        %v1282 = vld [vmem:[%s987 + $0x169] sm:$0xff]
        %v1283 = vld [vmem:[%s987 + $0x171] sm:$0xff]
        %s1284 = scalar_lea.vmem %s1, 4
        %v1285 = vld [vmem:[%s1284] sm:$0x1]
        %1287 = vset.pattern.permute.xlu0 0
        %1288 = vperm.xlu0 %1287, %v1252
        %v1289 = vpop.permute.xlu0 %1288
        %1292 = vset.pattern.permute.xlu0 0
        %1293 = vperm.xlu0 %1292, %v1253
        %v1294 = vpop.permute.xlu0 %1293
        %1297 = vset.pattern.permute.xlu0 0
        %1298 = vperm.xlu0 %1297, %v1254
        %v1299 = vpop.permute.xlu0 %1298
        %1302 = vset.pattern.permute.xlu0 0
        %1303 = vperm.xlu0 %1302, %v1255
        %v1304 = vpop.permute.xlu0 %1303
        %1307 = vset.pattern.permute.xlu0 0
        %1308 = vperm.xlu0 %1307, %v1256
        %v1309 = vpop.permute.xlu0 %1308
        %1312 = vset.pattern.permute.xlu0 0
        %1313 = vperm.xlu0 %1312, %v1257
        %v1314 = vpop.permute.xlu0 %1313
        %1317 = vset.pattern.permute.xlu0 0
        %1318 = vperm.xlu0 %1317, %v1258
        %v1319 = vpop.permute.xlu0 %1318
        %1322 = vset.pattern.permute.xlu0 0
        %1323 = vperm.xlu0 %1322, %v1259
        %v1324 = vpop.permute.xlu0 %1323
        %1327 = vset.pattern.permute.xlu0 0
        %1328 = vperm.xlu0 %1327, %v1260
        %v1329 = vpop.permute.xlu0 %1328
        %1332 = vset.pattern.permute.xlu0 0
        %1333 = vperm.xlu0 %1332, %v1261
        %v1334 = vpop.permute.xlu0 %1333
        %1337 = vset.pattern.permute.xlu0 0
        %1338 = vperm.xlu0 %1337, %v1262
        %v1339 = vpop.permute.xlu0 %1338
        %1342 = vset.pattern.permute.xlu0 0
        %1343 = vperm.xlu0 %1342, %v1263
        %v1344 = vpop.permute.xlu0 %1343
        %1347 = vset.pattern.permute.xlu0 0
        %1348 = vperm.xlu0 %1347, %v1264
        %v1349 = vpop.permute.xlu0 %1348
        %1352 = vset.pattern.permute.xlu0 0
        %1353 = vperm.xlu0 %1352, %v1265
        %v1354 = vpop.permute.xlu0 %1353
        %1357 = vset.pattern.permute.xlu0 0
        %1358 = vperm.xlu0 %1357, %v1266
        %v1359 = vpop.permute.xlu0 %1358
        %1362 = vset.pattern.permute.xlu0 0
        %1363 = vperm.xlu0 %1362, %v1267
        %v1364 = vpop.permute.xlu0 %1363
        %1367 = vset.pattern.permute.xlu0 0
        %1368 = vperm.xlu0 %1367, %v1268
        %v1369 = vpop.permute.xlu0 %1368
        %1372 = vset.pattern.permute.xlu0 0
        %1373 = vperm.xlu0 %1372, %v1269
        %v1374 = vpop.permute.xlu0 %1373
        %1377 = vset.pattern.permute.xlu0 0
        %1378 = vperm.xlu0 %1377, %v1270
        %v1379 = vpop.permute.xlu0 %1378
        %1382 = vset.pattern.permute.xlu0 0
        %1383 = vperm.xlu0 %1382, %v1271
        %v1384 = vpop.permute.xlu0 %1383
        %1387 = vset.pattern.permute.xlu0 0
        %1388 = vperm.xlu0 %1387, %v1272
        %v1389 = vpop.permute.xlu0 %1388
        %1392 = vset.pattern.permute.xlu0 0
        %1393 = vperm.xlu0 %1392, %v1273
        %v1394 = vpop.permute.xlu0 %1393
        %1397 = vset.pattern.permute.xlu0 0
        %1398 = vperm.xlu0 %1397, %v1274
        %v1399 = vpop.permute.xlu0 %1398
        %1402 = vset.pattern.permute.xlu0 0
        %1403 = vperm.xlu0 %1402, %v1275
        %v1404 = vpop.permute.xlu0 %1403
        %1407 = vset.pattern.permute.xlu0 0
        %1408 = vperm.xlu0 %1407, %v1276
        %v1409 = vpop.permute.xlu0 %1408
        %1412 = vset.pattern.permute.xlu0 0
        %1413 = vperm.xlu0 %1412, %v1277
        %v1414 = vpop.permute.xlu0 %1413
        %1417 = vset.pattern.permute.xlu0 0
        %1418 = vperm.xlu0 %1417, %v1278
        %v1419 = vpop.permute.xlu0 %1418
        %1422 = vset.pattern.permute.xlu0 0
        %1423 = vperm.xlu0 %1422, %v1279
        %v1424 = vpop.permute.xlu0 %1423
        %1427 = vset.pattern.permute.xlu0 0
        %1428 = vperm.xlu0 %1427, %v1280
        %v1429 = vpop.permute.xlu0 %1428
        %1432 = vset.pattern.permute.xlu0 0
        %1433 = vperm.xlu0 %1432, %v1281
        %v1434 = vpop.permute.xlu0 %1433
        %1437 = vset.pattern.permute.xlu0 0
        %1438 = vperm.xlu0 %1437, %v1282
        %v1439 = vpop.permute.xlu0 %1438
        %1442 = vset.pattern.permute.xlu0 0
        %1443 = vperm.xlu0 %1442, %v1283
        %v1444 = vpop.permute.xlu0 %1443
        %v1447 = vlaneseq
        %v1448 = vshrl.u32 %v1447, 7
        %v1449 = vsub.s32 0, %v1448
        %v1450 = vrot.slane %v1285, %v1449
        %v1452 = vmul.f32 %v1289, %v1450
        %v1453 = vmul.f32 %v1294, %v1450
        %v1454 = vmul.f32 %v1299, %v1450
        %v1455 = vmul.f32 %v1304, %v1450
        %v1456 = vmul.f32 %v1309, %v1450
        %v1457 = vmul.f32 %v1314, %v1450
        %v1458 = vmul.f32 %v1319, %v1450
        %v1459 = vmul.f32 %v1324, %v1450
        %v1460 = vmul.f32 %v1329, %v1450
        %v1461 = vmul.f32 %v1334, %v1450
        %v1462 = vmul.f32 %v1339, %v1450
        %v1463 = vmul.f32 %v1344, %v1450
        %v1464 = vmul.f32 %v1349, %v1450
        %v1465 = vmul.f32 %v1354, %v1450
        %v1466 = vmul.f32 %v1359, %v1450
        %v1467 = vmul.f32 %v1364, %v1450
        %v1468 = vmul.f32 %v1369, %v1450
        %v1469 = vmul.f32 %v1374, %v1450
        %v1470 = vmul.f32 %v1379, %v1450
        %v1471 = vmul.f32 %v1384, %v1450
        %v1472 = vmul.f32 %v1389, %v1450
        %v1473 = vmul.f32 %v1394, %v1450
        %v1474 = vmul.f32 %v1399, %v1450
        %v1475 = vmul.f32 %v1404, %v1450
        %v1476 = vmul.f32 %v1409, %v1450
        %v1477 = vmul.f32 %v1414, %v1450
        %v1478 = vmul.f32 %v1419, %v1450
        %v1479 = vmul.f32 %v1424, %v1450
        %v1480 = vmul.f32 %v1429, %v1450
        %v1481 = vmul.f32 %v1434, %v1450
        %v1482 = vmul.f32 %v1439, %v1450
        %v1483 = vmul.f32 %v1444, %v1450
        %v1484 = vadd.f32 %v1220, %v1452
        %v1485 = vadd.f32 %v1221, %v1453
        %v1486 = vadd.f32 %v1222, %v1454
        %v1487 = vadd.f32 %v1223, %v1455
        %v1488 = vadd.f32 %v1224, %v1456
        %v1489 = vadd.f32 %v1225, %v1457
        %v1490 = vadd.f32 %v1226, %v1458
        %v1491 = vadd.f32 %v1227, %v1459
        %v1492 = vadd.f32 %v1228, %v1460
        %v1493 = vadd.f32 %v1229, %v1461
        %v1494 = vadd.f32 %v1230, %v1462
        %v1495 = vadd.f32 %v1231, %v1463
        %v1496 = vadd.f32 %v1232, %v1464
        %v1497 = vadd.f32 %v1233, %v1465
        %v1498 = vadd.f32 %v1234, %v1466
        %v1499 = vadd.f32 %v1235, %v1467
        %v1500 = vadd.f32 %v1236, %v1468
        %v1501 = vadd.f32 %v1237, %v1469
        %v1502 = vadd.f32 %v1238, %v1470
        %v1503 = vadd.f32 %v1239, %v1471
        %v1504 = vadd.f32 %v1240, %v1472
        %v1505 = vadd.f32 %v1241, %v1473
        %v1506 = vadd.f32 %v1242, %v1474
        %v1507 = vadd.f32 %v1243, %v1475
        %v1508 = vadd.f32 %v1244, %v1476
        %v1509 = vadd.f32 %v1245, %v1477
        %v1510 = vadd.f32 %v1246, %v1478
        %v1511 = vadd.f32 %v1247, %v1479
        %v1512 = vadd.f32 %v1248, %v1480
        %v1513 = vadd.f32 %v1249, %v1481
        %v1514 = vadd.f32 %v1250, %v1482
        %v1515 = vadd.f32 %v1251, %v1483
        %v1516 = vld [vmem:[%s987 + $0x2] sm:$0xff]
        %v1517 = vld [vmem:[%s987 + $0xa] sm:$0xff]
        %v1518 = vld [vmem:[%s987 + $0x1a] sm:$0xff]
        %v1519 = vld [vmem:[%s987 + $0x22] sm:$0xff]
        %v1520 = vld [vmem:[%s987 + $0x32] sm:$0xff]
        %v1521 = vld [vmem:[%s987 + $0x3a] sm:$0xff]
        %v1522 = vld [vmem:[%s987 + $0x4a] sm:$0xff]
        %v1523 = vld [vmem:[%s987 + $0x52] sm:$0xff]
        %v1524 = vld [vmem:[%s987 + $0x62] sm:$0xff]
        %v1525 = vld [vmem:[%s987 + $0x6a] sm:$0xff]
        %v1526 = vld [vmem:[%s987 + $0x7a] sm:$0xff]
        %v1527 = vld [vmem:[%s987 + $0x82] sm:$0xff]
        %v1528 = vld [vmem:[%s987 + $0x92] sm:$0xff]
        %v1529 = vld [vmem:[%s987 + $0x9a] sm:$0xff]
        %v1530 = vld [vmem:[%s987 + $0xaa] sm:$0xff]
        %v1531 = vld [vmem:[%s987 + $0xb2] sm:$0xff]
        %v1532 = vld [vmem:[%s987 + $0xc2] sm:$0xff]
        %v1533 = vld [vmem:[%s987 + $0xca] sm:$0xff]
        %v1534 = vld [vmem:[%s987 + $0xda] sm:$0xff]
        %v1535 = vld [vmem:[%s987 + $0xe2] sm:$0xff]
        %v1536 = vld [vmem:[%s987 + $0xf2] sm:$0xff]
        %v1537 = vld [vmem:[%s987 + $0xfa] sm:$0xff]
        %v1538 = vld [vmem:[%s987 + $0x10a] sm:$0xff]
        %v1539 = vld [vmem:[%s987 + $0x112] sm:$0xff]
        %v1540 = vld [vmem:[%s987 + $0x122] sm:$0xff]
        %v1541 = vld [vmem:[%s987 + $0x12a] sm:$0xff]
        %v1542 = vld [vmem:[%s987 + $0x13a] sm:$0xff]
        %v1543 = vld [vmem:[%s987 + $0x142] sm:$0xff]
        %v1544 = vld [vmem:[%s987 + $0x152] sm:$0xff]
        %v1545 = vld [vmem:[%s987 + $0x15a] sm:$0xff]
        %v1546 = vld [vmem:[%s987 + $0x16a] sm:$0xff]
        %v1547 = vld [vmem:[%s987 + $0x172] sm:$0xff]
        %s1548 = scalar_lea.vmem %s1, 5
        %v1549 = vld [vmem:[%s1548] sm:$0x1]
        %1551 = vset.pattern.permute.xlu0 0
        %1552 = vperm.xlu0 %1551, %v1516
        %v1553 = vpop.permute.xlu0 %1552
        %1556 = vset.pattern.permute.xlu0 0
        %1557 = vperm.xlu0 %1556, %v1517
        %v1558 = vpop.permute.xlu0 %1557
        %1561 = vset.pattern.permute.xlu0 0
        %1562 = vperm.xlu0 %1561, %v1518
        %v1563 = vpop.permute.xlu0 %1562
        %1566 = vset.pattern.permute.xlu0 0
        %1567 = vperm.xlu0 %1566, %v1519
        %v1568 = vpop.permute.xlu0 %1567
        %1571 = vset.pattern.permute.xlu0 0
        %1572 = vperm.xlu0 %1571, %v1520
        %v1573 = vpop.permute.xlu0 %1572
        %1576 = vset.pattern.permute.xlu0 0
        %1577 = vperm.xlu0 %1576, %v1521
        %v1578 = vpop.permute.xlu0 %1577
        %1581 = vset.pattern.permute.xlu0 0
        %1582 = vperm.xlu0 %1581, %v1522
        %v1583 = vpop.permute.xlu0 %1582
        %1586 = vset.pattern.permute.xlu0 0
        %1587 = vperm.xlu0 %1586, %v1523
        %v1588 = vpop.permute.xlu0 %1587
        %1591 = vset.pattern.permute.xlu0 0
        %1592 = vperm.xlu0 %1591, %v1524
        %v1593 = vpop.permute.xlu0 %1592
        %1596 = vset.pattern.permute.xlu0 0
        %1597 = vperm.xlu0 %1596, %v1525
        %v1598 = vpop.permute.xlu0 %1597
        %1601 = vset.pattern.permute.xlu0 0
        %1602 = vperm.xlu0 %1601, %v1526
        %v1603 = vpop.permute.xlu0 %1602
        %1606 = vset.pattern.permute.xlu0 0
        %1607 = vperm.xlu0 %1606, %v1527
        %v1608 = vpop.permute.xlu0 %1607
        %1611 = vset.pattern.permute.xlu0 0
        %1612 = vperm.xlu0 %1611, %v1528
        %v1613 = vpop.permute.xlu0 %1612
        %1616 = vset.pattern.permute.xlu0 0
        %1617 = vperm.xlu0 %1616, %v1529
        %v1618 = vpop.permute.xlu0 %1617
        %1621 = vset.pattern.permute.xlu0 0
        %1622 = vperm.xlu0 %1621, %v1530
        %v1623 = vpop.permute.xlu0 %1622
        %1626 = vset.pattern.permute.xlu0 0
        %1627 = vperm.xlu0 %1626, %v1531
        %v1628 = vpop.permute.xlu0 %1627
        %1631 = vset.pattern.permute.xlu0 0
        %1632 = vperm.xlu0 %1631, %v1532
        %v1633 = vpop.permute.xlu0 %1632
        %1636 = vset.pattern.permute.xlu0 0
        %1637 = vperm.xlu0 %1636, %v1533
        %v1638 = vpop.permute.xlu0 %1637
        %1641 = vset.pattern.permute.xlu0 0
        %1642 = vperm.xlu0 %1641, %v1534
        %v1643 = vpop.permute.xlu0 %1642
        %1646 = vset.pattern.permute.xlu0 0
        %1647 = vperm.xlu0 %1646, %v1535
        %v1648 = vpop.permute.xlu0 %1647
        %1651 = vset.pattern.permute.xlu0 0
        %1652 = vperm.xlu0 %1651, %v1536
        %v1653 = vpop.permute.xlu0 %1652
        %1656 = vset.pattern.permute.xlu0 0
        %1657 = vperm.xlu0 %1656, %v1537
        %v1658 = vpop.permute.xlu0 %1657
        %1661 = vset.pattern.permute.xlu0 0
        %1662 = vperm.xlu0 %1661, %v1538
        %v1663 = vpop.permute.xlu0 %1662
        %1666 = vset.pattern.permute.xlu0 0
        %1667 = vperm.xlu0 %1666, %v1539
        %v1668 = vpop.permute.xlu0 %1667
        %1671 = vset.pattern.permute.xlu0 0
        %1672 = vperm.xlu0 %1671, %v1540
        %v1673 = vpop.permute.xlu0 %1672
        %1676 = vset.pattern.permute.xlu0 0
        %1677 = vperm.xlu0 %1676, %v1541
        %v1678 = vpop.permute.xlu0 %1677
        %1681 = vset.pattern.permute.xlu0 0
        %1682 = vperm.xlu0 %1681, %v1542
        %v1683 = vpop.permute.xlu0 %1682
        %1686 = vset.pattern.permute.xlu0 0
        %1687 = vperm.xlu0 %1686, %v1543
        %v1688 = vpop.permute.xlu0 %1687
        %1691 = vset.pattern.permute.xlu0 0
        %1692 = vperm.xlu0 %1691, %v1544
        %v1693 = vpop.permute.xlu0 %1692
        %1696 = vset.pattern.permute.xlu0 0
        %1697 = vperm.xlu0 %1696, %v1545
        %v1698 = vpop.permute.xlu0 %1697
        %1701 = vset.pattern.permute.xlu0 0
        %1702 = vperm.xlu0 %1701, %v1546
        %v1703 = vpop.permute.xlu0 %1702
        %1706 = vset.pattern.permute.xlu0 0
        %1707 = vperm.xlu0 %1706, %v1547
        %v1708 = vpop.permute.xlu0 %1707
        %v1711 = vlaneseq
        %v1712 = vshrl.u32 %v1711, 7
        %v1713 = vsub.s32 0, %v1712
        %v1714 = vrot.slane %v1549, %v1713
        %v1716 = vmul.f32 %v1553, %v1714
        %v1717 = vmul.f32 %v1558, %v1714
        %v1718 = vmul.f32 %v1563, %v1714
        %v1719 = vmul.f32 %v1568, %v1714
        %v1720 = vmul.f32 %v1573, %v1714
        %v1721 = vmul.f32 %v1578, %v1714
        %v1722 = vmul.f32 %v1583, %v1714
        %v1723 = vmul.f32 %v1588, %v1714
        %v1724 = vmul.f32 %v1593, %v1714
        %v1725 = vmul.f32 %v1598, %v1714
        %v1726 = vmul.f32 %v1603, %v1714
        %v1727 = vmul.f32 %v1608, %v1714
        %v1728 = vmul.f32 %v1613, %v1714
        %v1729 = vmul.f32 %v1618, %v1714
        %v1730 = vmul.f32 %v1623, %v1714
        %v1731 = vmul.f32 %v1628, %v1714
        %v1732 = vmul.f32 %v1633, %v1714
        %v1733 = vmul.f32 %v1638, %v1714
        %v1734 = vmul.f32 %v1643, %v1714
        %v1735 = vmul.f32 %v1648, %v1714
        %v1736 = vmul.f32 %v1653, %v1714
        %v1737 = vmul.f32 %v1658, %v1714
        %v1738 = vmul.f32 %v1663, %v1714
        %v1739 = vmul.f32 %v1668, %v1714
        %v1740 = vmul.f32 %v1673, %v1714
        %v1741 = vmul.f32 %v1678, %v1714
        %v1742 = vmul.f32 %v1683, %v1714
        %v1743 = vmul.f32 %v1688, %v1714
        %v1744 = vmul.f32 %v1693, %v1714
        %v1745 = vmul.f32 %v1698, %v1714
        %v1746 = vmul.f32 %v1703, %v1714
        %v1747 = vmul.f32 %v1708, %v1714
        %v1748 = vadd.f32 %v1484, %v1716
        %v1749 = vadd.f32 %v1485, %v1717
        %v1750 = vadd.f32 %v1486, %v1718
        %v1751 = vadd.f32 %v1487, %v1719
        %v1752 = vadd.f32 %v1488, %v1720
        %v1753 = vadd.f32 %v1489, %v1721
        %v1754 = vadd.f32 %v1490, %v1722
        %v1755 = vadd.f32 %v1491, %v1723
        %v1756 = vadd.f32 %v1492, %v1724
        %v1757 = vadd.f32 %v1493, %v1725
        %v1758 = vadd.f32 %v1494, %v1726
        %v1759 = vadd.f32 %v1495, %v1727
        %v1760 = vadd.f32 %v1496, %v1728
        %v1761 = vadd.f32 %v1497, %v1729
        %v1762 = vadd.f32 %v1498, %v1730
        %v1763 = vadd.f32 %v1499, %v1731
        %v1764 = vadd.f32 %v1500, %v1732
        %v1765 = vadd.f32 %v1501, %v1733
        %v1766 = vadd.f32 %v1502, %v1734
        %v1767 = vadd.f32 %v1503, %v1735
        %v1768 = vadd.f32 %v1504, %v1736
        %v1769 = vadd.f32 %v1505, %v1737
        %v1770 = vadd.f32 %v1506, %v1738
        %v1771 = vadd.f32 %v1507, %v1739
        %v1772 = vadd.f32 %v1508, %v1740
        %v1773 = vadd.f32 %v1509, %v1741
        %v1774 = vadd.f32 %v1510, %v1742
        %v1775 = vadd.f32 %v1511, %v1743
        %v1776 = vadd.f32 %v1512, %v1744
        %v1777 = vadd.f32 %v1513, %v1745
        %v1778 = vadd.f32 %v1514, %v1746
        %v1779 = vadd.f32 %v1515, %v1747
        %s1780 = scalar_lea.vmem %s195, 48
        %v1781 = vld [vmem:[%s1780] sm:$0xff]
        %v1782 = vld [vmem:[%s1780 + $0x8] sm:$0xff]
        %v1783 = vld [vmem:[%s1780 + $0x18] sm:$0xff]
        %v1784 = vld [vmem:[%s1780 + $0x20] sm:$0xff]
        %v1785 = vld [vmem:[%s1780 + $0x30] sm:$0xff]
        %v1786 = vld [vmem:[%s1780 + $0x38] sm:$0xff]
        %v1787 = vld [vmem:[%s1780 + $0x48] sm:$0xff]
        %v1788 = vld [vmem:[%s1780 + $0x50] sm:$0xff]
        %v1789 = vld [vmem:[%s1780 + $0x60] sm:$0xff]
        %v1790 = vld [vmem:[%s1780 + $0x68] sm:$0xff]
        %v1791 = vld [vmem:[%s1780 + $0x78] sm:$0xff]
        %v1792 = vld [vmem:[%s1780 + $0x80] sm:$0xff]
        %v1793 = vld [vmem:[%s1780 + $0x90] sm:$0xff]
        %v1794 = vld [vmem:[%s1780 + $0x98] sm:$0xff]
        %v1795 = vld [vmem:[%s1780 + $0xa8] sm:$0xff]
        %v1796 = vld [vmem:[%s1780 + $0xb0] sm:$0xff]
        %v1797 = vld [vmem:[%s1780 + $0xc0] sm:$0xff]
        %v1798 = vld [vmem:[%s1780 + $0xc8] sm:$0xff]
        %v1799 = vld [vmem:[%s1780 + $0xd8] sm:$0xff]
        %v1800 = vld [vmem:[%s1780 + $0xe0] sm:$0xff]
        %v1801 = vld [vmem:[%s1780 + $0xf0] sm:$0xff]
        %v1802 = vld [vmem:[%s1780 + $0xf8] sm:$0xff]
        %v1803 = vld [vmem:[%s1780 + $0x108] sm:$0xff]
        %v1804 = vld [vmem:[%s1780 + $0x110] sm:$0xff]
        %v1805 = vld [vmem:[%s1780 + $0x120] sm:$0xff]
        %v1806 = vld [vmem:[%s1780 + $0x128] sm:$0xff]
        %v1807 = vld [vmem:[%s1780 + $0x138] sm:$0xff]
        %v1808 = vld [vmem:[%s1780 + $0x140] sm:$0xff]
        %v1809 = vld [vmem:[%s1780 + $0x150] sm:$0xff]
        %v1810 = vld [vmem:[%s1780 + $0x158] sm:$0xff]
        %v1811 = vld [vmem:[%s1780 + $0x168] sm:$0xff]
        %v1812 = vld [vmem:[%s1780 + $0x170] sm:$0xff]
        %s1813 = scalar_lea.vmem %s1, 6
        %v1814 = vld [vmem:[%s1813] sm:$0x1]
        %1816 = vset.pattern.permute.xlu0 0
        %1817 = vperm.xlu0 %1816, %v1781
        %v1818 = vpop.permute.xlu0 %1817
        %1821 = vset.pattern.permute.xlu0 0
        %1822 = vperm.xlu0 %1821, %v1782
        %v1823 = vpop.permute.xlu0 %1822
        %1826 = vset.pattern.permute.xlu0 0
        %1827 = vperm.xlu0 %1826, %v1783
        %v1828 = vpop.permute.xlu0 %1827
        %1831 = vset.pattern.permute.xlu0 0
        %1832 = vperm.xlu0 %1831, %v1784
        %v1833 = vpop.permute.xlu0 %1832
        %1836 = vset.pattern.permute.xlu0 0
        %1837 = vperm.xlu0 %1836, %v1785
        %v1838 = vpop.permute.xlu0 %1837
        %1841 = vset.pattern.permute.xlu0 0
        %1842 = vperm.xlu0 %1841, %v1786
        %v1843 = vpop.permute.xlu0 %1842
        %1846 = vset.pattern.permute.xlu0 0
        %1847 = vperm.xlu0 %1846, %v1787
        %v1848 = vpop.permute.xlu0 %1847
        %1851 = vset.pattern.permute.xlu0 0
        %1852 = vperm.xlu0 %1851, %v1788
        %v1853 = vpop.permute.xlu0 %1852
        %1856 = vset.pattern.permute.xlu0 0
        %1857 = vperm.xlu0 %1856, %v1789
        %v1858 = vpop.permute.xlu0 %1857
        %1861 = vset.pattern.permute.xlu0 0
        %1862 = vperm.xlu0 %1861, %v1790
        %v1863 = vpop.permute.xlu0 %1862
        %1866 = vset.pattern.permute.xlu0 0
        %1867 = vperm.xlu0 %1866, %v1791
        %v1868 = vpop.permute.xlu0 %1867
        %1871 = vset.pattern.permute.xlu0 0
        %1872 = vperm.xlu0 %1871, %v1792
        %v1873 = vpop.permute.xlu0 %1872
        %1876 = vset.pattern.permute.xlu0 0
        %1877 = vperm.xlu0 %1876, %v1793
        %v1878 = vpop.permute.xlu0 %1877
        %1881 = vset.pattern.permute.xlu0 0
        %1882 = vperm.xlu0 %1881, %v1794
        %v1883 = vpop.permute.xlu0 %1882
        %1886 = vset.pattern.permute.xlu0 0
        %1887 = vperm.xlu0 %1886, %v1795
        %v1888 = vpop.permute.xlu0 %1887
        %1891 = vset.pattern.permute.xlu0 0
        %1892 = vperm.xlu0 %1891, %v1796
        %v1893 = vpop.permute.xlu0 %1892
        %1896 = vset.pattern.permute.xlu0 0
        %1897 = vperm.xlu0 %1896, %v1797
        %v1898 = vpop.permute.xlu0 %1897
        %1901 = vset.pattern.permute.xlu0 0
        %1902 = vperm.xlu0 %1901, %v1798
        %v1903 = vpop.permute.xlu0 %1902
        %1906 = vset.pattern.permute.xlu0 0
        %1907 = vperm.xlu0 %1906, %v1799
        %v1908 = vpop.permute.xlu0 %1907
        %1911 = vset.pattern.permute.xlu0 0
        %1912 = vperm.xlu0 %1911, %v1800
        %v1913 = vpop.permute.xlu0 %1912
        %1916 = vset.pattern.permute.xlu0 0
        %1917 = vperm.xlu0 %1916, %v1801
        %v1918 = vpop.permute.xlu0 %1917
        %1921 = vset.pattern.permute.xlu0 0
        %1922 = vperm.xlu0 %1921, %v1802
        %v1923 = vpop.permute.xlu0 %1922
        %1926 = vset.pattern.permute.xlu0 0
        %1927 = vperm.xlu0 %1926, %v1803
        %v1928 = vpop.permute.xlu0 %1927
        %1931 = vset.pattern.permute.xlu0 0
        %1932 = vperm.xlu0 %1931, %v1804
        %v1933 = vpop.permute.xlu0 %1932
        %1936 = vset.pattern.permute.xlu0 0
        %1937 = vperm.xlu0 %1936, %v1805
        %v1938 = vpop.permute.xlu0 %1937
        %1941 = vset.pattern.permute.xlu0 0
        %1942 = vperm.xlu0 %1941, %v1806
        %v1943 = vpop.permute.xlu0 %1942
        %1946 = vset.pattern.permute.xlu0 0
        %1947 = vperm.xlu0 %1946, %v1807
        %v1948 = vpop.permute.xlu0 %1947
        %1951 = vset.pattern.permute.xlu0 0
        %1952 = vperm.xlu0 %1951, %v1808
        %v1953 = vpop.permute.xlu0 %1952
        %1956 = vset.pattern.permute.xlu0 0
        %1957 = vperm.xlu0 %1956, %v1809
        %v1958 = vpop.permute.xlu0 %1957
        %1961 = vset.pattern.permute.xlu0 0
        %1962 = vperm.xlu0 %1961, %v1810
        %v1963 = vpop.permute.xlu0 %1962
        %1966 = vset.pattern.permute.xlu0 0
        %1967 = vperm.xlu0 %1966, %v1811
        %v1968 = vpop.permute.xlu0 %1967
        %1971 = vset.pattern.permute.xlu0 0
        %1972 = vperm.xlu0 %1971, %v1812
        %v1973 = vpop.permute.xlu0 %1972
        %v1976 = vlaneseq
        %v1977 = vshrl.u32 %v1976, 7
        %v1978 = vsub.s32 0, %v1977
        %v1979 = vrot.slane %v1814, %v1978
        %v1981 = vmul.f32 %v1818, %v1979
        %v1982 = vmul.f32 %v1823, %v1979
        %v1983 = vmul.f32 %v1828, %v1979
        %v1984 = vmul.f32 %v1833, %v1979
        %v1985 = vmul.f32 %v1838, %v1979
        %v1986 = vmul.f32 %v1843, %v1979
        %v1987 = vmul.f32 %v1848, %v1979
        %v1988 = vmul.f32 %v1853, %v1979
        %v1989 = vmul.f32 %v1858, %v1979
        %v1990 = vmul.f32 %v1863, %v1979
        %v1991 = vmul.f32 %v1868, %v1979
        %v1992 = vmul.f32 %v1873, %v1979
        %v1993 = vmul.f32 %v1878, %v1979
        %v1994 = vmul.f32 %v1883, %v1979
        %v1995 = vmul.f32 %v1888, %v1979
        %v1996 = vmul.f32 %v1893, %v1979
        %v1997 = vmul.f32 %v1898, %v1979
        %v1998 = vmul.f32 %v1903, %v1979
        %v1999 = vmul.f32 %v1908, %v1979
        %v2000 = vmul.f32 %v1913, %v1979
        %v2001 = vmul.f32 %v1918, %v1979
        %v2002 = vmul.f32 %v1923, %v1979
        %v2003 = vmul.f32 %v1928, %v1979
        %v2004 = vmul.f32 %v1933, %v1979
        %v2005 = vmul.f32 %v1938, %v1979
        %v2006 = vmul.f32 %v1943, %v1979
        %v2007 = vmul.f32 %v1948, %v1979
        %v2008 = vmul.f32 %v1953, %v1979
        %v2009 = vmul.f32 %v1958, %v1979
        %v2010 = vmul.f32 %v1963, %v1979
        %v2011 = vmul.f32 %v1968, %v1979
        %v2012 = vmul.f32 %v1973, %v1979
        %v2013 = vadd.f32 %v1748, %v1981
        %v2014 = vadd.f32 %v1749, %v1982
        %v2015 = vadd.f32 %v1750, %v1983
        %v2016 = vadd.f32 %v1751, %v1984
        %v2017 = vadd.f32 %v1752, %v1985
        %v2018 = vadd.f32 %v1753, %v1986
        %v2019 = vadd.f32 %v1754, %v1987
        %v2020 = vadd.f32 %v1755, %v1988
        %v2021 = vadd.f32 %v1756, %v1989
        %v2022 = vadd.f32 %v1757, %v1990
        %v2023 = vadd.f32 %v1758, %v1991
        %v2024 = vadd.f32 %v1759, %v1992
        %v2025 = vadd.f32 %v1760, %v1993
        %v2026 = vadd.f32 %v1761, %v1994
        %v2027 = vadd.f32 %v1762, %v1995
        %v2028 = vadd.f32 %v1763, %v1996
        %v2029 = vadd.f32 %v1764, %v1997
        %v2030 = vadd.f32 %v1765, %v1998
        %v2031 = vadd.f32 %v1766, %v1999
        %v2032 = vadd.f32 %v1767, %v2000
        %v2033 = vadd.f32 %v1768, %v2001
        %v2034 = vadd.f32 %v1769, %v2002
        %v2035 = vadd.f32 %v1770, %v2003
        %v2036 = vadd.f32 %v1771, %v2004
        %v2037 = vadd.f32 %v1772, %v2005
        %v2038 = vadd.f32 %v1773, %v2006
        %v2039 = vadd.f32 %v1774, %v2007
        %v2040 = vadd.f32 %v1775, %v2008
        %v2041 = vadd.f32 %v1776, %v2009
        %v2042 = vadd.f32 %v1777, %v2010
        %v2043 = vadd.f32 %v1778, %v2011
        %v2044 = vadd.f32 %v1779, %v2012
        %v2045 = vld [vmem:[%s1780 + $0x1] sm:$0xff]
        %v2046 = vld [vmem:[%s1780 + $0x9] sm:$0xff]
        %v2047 = vld [vmem:[%s1780 + $0x19] sm:$0xff]
        %v2048 = vld [vmem:[%s1780 + $0x21] sm:$0xff]
        %v2049 = vld [vmem:[%s1780 + $0x31] sm:$0xff]
        %v2050 = vld [vmem:[%s1780 + $0x39] sm:$0xff]
        %v2051 = vld [vmem:[%s1780 + $0x49] sm:$0xff]
        %v2052 = vld [vmem:[%s1780 + $0x51] sm:$0xff]
        %v2053 = vld [vmem:[%s1780 + $0x61] sm:$0xff]
        %v2054 = vld [vmem:[%s1780 + $0x69] sm:$0xff]
        %v2055 = vld [vmem:[%s1780 + $0x79] sm:$0xff]
        %v2056 = vld [vmem:[%s1780 + $0x81] sm:$0xff]
        %v2057 = vld [vmem:[%s1780 + $0x91] sm:$0xff]
        %v2058 = vld [vmem:[%s1780 + $0x99] sm:$0xff]
        %v2059 = vld [vmem:[%s1780 + $0xa9] sm:$0xff]
        %v2060 = vld [vmem:[%s1780 + $0xb1] sm:$0xff]
        %v2061 = vld [vmem:[%s1780 + $0xc1] sm:$0xff]
        %v2062 = vld [vmem:[%s1780 + $0xc9] sm:$0xff]
        %v2063 = vld [vmem:[%s1780 + $0xd9] sm:$0xff]
        %v2064 = vld [vmem:[%s1780 + $0xe1] sm:$0xff]
        %v2065 = vld [vmem:[%s1780 + $0xf1] sm:$0xff]
        %v2066 = vld [vmem:[%s1780 + $0xf9] sm:$0xff]
        %v2067 = vld [vmem:[%s1780 + $0x109] sm:$0xff]
        %v2068 = vld [vmem:[%s1780 + $0x111] sm:$0xff]
        %v2069 = vld [vmem:[%s1780 + $0x121] sm:$0xff]
        %v2070 = vld [vmem:[%s1780 + $0x129] sm:$0xff]
        %v2071 = vld [vmem:[%s1780 + $0x139] sm:$0xff]
        %v2072 = vld [vmem:[%s1780 + $0x141] sm:$0xff]
        %v2073 = vld [vmem:[%s1780 + $0x151] sm:$0xff]
        %v2074 = vld [vmem:[%s1780 + $0x159] sm:$0xff]
        %v2075 = vld [vmem:[%s1780 + $0x169] sm:$0xff]
        %v2076 = vld [vmem:[%s1780 + $0x171] sm:$0xff]
        %s2077 = scalar_lea.vmem %s1, 7
        %v2078 = vld [vmem:[%s2077] sm:$0x1]
        %2080 = vset.pattern.permute.xlu0 0
        %2081 = vperm.xlu0 %2080, %v2045
        %v2082 = vpop.permute.xlu0 %2081
        %2085 = vset.pattern.permute.xlu0 0
        %2086 = vperm.xlu0 %2085, %v2046
        %v2087 = vpop.permute.xlu0 %2086
        %2090 = vset.pattern.permute.xlu0 0
        %2091 = vperm.xlu0 %2090, %v2047
        %v2092 = vpop.permute.xlu0 %2091
        %2095 = vset.pattern.permute.xlu0 0
        %2096 = vperm.xlu0 %2095, %v2048
        %v2097 = vpop.permute.xlu0 %2096
        %2100 = vset.pattern.permute.xlu0 0
        %2101 = vperm.xlu0 %2100, %v2049
        %v2102 = vpop.permute.xlu0 %2101
        %2105 = vset.pattern.permute.xlu0 0
        %2106 = vperm.xlu0 %2105, %v2050
        %v2107 = vpop.permute.xlu0 %2106
        %2110 = vset.pattern.permute.xlu0 0
        %2111 = vperm.xlu0 %2110, %v2051
        %v2112 = vpop.permute.xlu0 %2111
        %2115 = vset.pattern.permute.xlu0 0
        %2116 = vperm.xlu0 %2115, %v2052
        %v2117 = vpop.permute.xlu0 %2116
        %2120 = vset.pattern.permute.xlu0 0
        %2121 = vperm.xlu0 %2120, %v2053
        %v2122 = vpop.permute.xlu0 %2121
        %2125 = vset.pattern.permute.xlu0 0
        %2126 = vperm.xlu0 %2125, %v2054
        %v2127 = vpop.permute.xlu0 %2126
        %2130 = vset.pattern.permute.xlu0 0
        %2131 = vperm.xlu0 %2130, %v2055
        %v2132 = vpop.permute.xlu0 %2131
        %2135 = vset.pattern.permute.xlu0 0
        %2136 = vperm.xlu0 %2135, %v2056
        %v2137 = vpop.permute.xlu0 %2136
        %2140 = vset.pattern.permute.xlu0 0
        %2141 = vperm.xlu0 %2140, %v2057
        %v2142 = vpop.permute.xlu0 %2141
        %2145 = vset.pattern.permute.xlu0 0
        %2146 = vperm.xlu0 %2145, %v2058
        %v2147 = vpop.permute.xlu0 %2146
        %2150 = vset.pattern.permute.xlu0 0
        %2151 = vperm.xlu0 %2150, %v2059
        %v2152 = vpop.permute.xlu0 %2151
        %2155 = vset.pattern.permute.xlu0 0
        %2156 = vperm.xlu0 %2155, %v2060
        %v2157 = vpop.permute.xlu0 %2156
        %2160 = vset.pattern.permute.xlu0 0
        %2161 = vperm.xlu0 %2160, %v2061
        %v2162 = vpop.permute.xlu0 %2161
        %2165 = vset.pattern.permute.xlu0 0
        %2166 = vperm.xlu0 %2165, %v2062
        %v2167 = vpop.permute.xlu0 %2166
        %2170 = vset.pattern.permute.xlu0 0
        %2171 = vperm.xlu0 %2170, %v2063
        %v2172 = vpop.permute.xlu0 %2171
        %2175 = vset.pattern.permute.xlu0 0
        %2176 = vperm.xlu0 %2175, %v2064
        %v2177 = vpop.permute.xlu0 %2176
        %2180 = vset.pattern.permute.xlu0 0
        %2181 = vperm.xlu0 %2180, %v2065
        %v2182 = vpop.permute.xlu0 %2181
        %2185 = vset.pattern.permute.xlu0 0
        %2186 = vperm.xlu0 %2185, %v2066
        %v2187 = vpop.permute.xlu0 %2186
        %2190 = vset.pattern.permute.xlu0 0
        %2191 = vperm.xlu0 %2190, %v2067
        %v2192 = vpop.permute.xlu0 %2191
        %2195 = vset.pattern.permute.xlu0 0
        %2196 = vperm.xlu0 %2195, %v2068
        %v2197 = vpop.permute.xlu0 %2196
        %2200 = vset.pattern.permute.xlu0 0
        %2201 = vperm.xlu0 %2200, %v2069
        %v2202 = vpop.permute.xlu0 %2201
        %2205 = vset.pattern.permute.xlu0 0
        %2206 = vperm.xlu0 %2205, %v2070
        %v2207 = vpop.permute.xlu0 %2206
        %2210 = vset.pattern.permute.xlu0 0
        %2211 = vperm.xlu0 %2210, %v2071
        %v2212 = vpop.permute.xlu0 %2211
        %2215 = vset.pattern.permute.xlu0 0
        %2216 = vperm.xlu0 %2215, %v2072
        %v2217 = vpop.permute.xlu0 %2216
        %2220 = vset.pattern.permute.xlu0 0
        %2221 = vperm.xlu0 %2220, %v2073
        %v2222 = vpop.permute.xlu0 %2221
        %2225 = vset.pattern.permute.xlu0 0
        %2226 = vperm.xlu0 %2225, %v2074
        %v2227 = vpop.permute.xlu0 %2226
        %2230 = vset.pattern.permute.xlu0 0
        %2231 = vperm.xlu0 %2230, %v2075
        %v2232 = vpop.permute.xlu0 %2231
        %2235 = vset.pattern.permute.xlu0 0
        %2236 = vperm.xlu0 %2235, %v2076
        %v2237 = vpop.permute.xlu0 %2236
        %v2240 = vlaneseq
        %v2241 = vshrl.u32 %v2240, 7
        %v2242 = vsub.s32 0, %v2241
        %v2243 = vrot.slane %v2078, %v2242
        %v2245 = vmul.f32 %v2082, %v2243
        %v2246 = vmul.f32 %v2087, %v2243
        %v2247 = vmul.f32 %v2092, %v2243
        %v2248 = vmul.f32 %v2097, %v2243
        %v2249 = vmul.f32 %v2102, %v2243
        %v2250 = vmul.f32 %v2107, %v2243
        %v2251 = vmul.f32 %v2112, %v2243
        %v2252 = vmul.f32 %v2117, %v2243
        %v2253 = vmul.f32 %v2122, %v2243
        %v2254 = vmul.f32 %v2127, %v2243
        %v2255 = vmul.f32 %v2132, %v2243
        %v2256 = vmul.f32 %v2137, %v2243
        %v2257 = vmul.f32 %v2142, %v2243
        %v2258 = vmul.f32 %v2147, %v2243
        %v2259 = vmul.f32 %v2152, %v2243
        %v2260 = vmul.f32 %v2157, %v2243
        %v2261 = vmul.f32 %v2162, %v2243
        %v2262 = vmul.f32 %v2167, %v2243
        %v2263 = vmul.f32 %v2172, %v2243
        %v2264 = vmul.f32 %v2177, %v2243
        %v2265 = vmul.f32 %v2182, %v2243
        %v2266 = vmul.f32 %v2187, %v2243
        %v2267 = vmul.f32 %v2192, %v2243
        %v2268 = vmul.f32 %v2197, %v2243
        %v2269 = vmul.f32 %v2202, %v2243
        %v2270 = vmul.f32 %v2207, %v2243
        %v2271 = vmul.f32 %v2212, %v2243
        %v2272 = vmul.f32 %v2217, %v2243
        %v2273 = vmul.f32 %v2222, %v2243
        %v2274 = vmul.f32 %v2227, %v2243
        %v2275 = vmul.f32 %v2232, %v2243
        %v2276 = vmul.f32 %v2237, %v2243
        %v2277 = vadd.f32 %v2013, %v2245
        %v2278 = vadd.f32 %v2014, %v2246
        %v2279 = vadd.f32 %v2015, %v2247
        %v2280 = vadd.f32 %v2016, %v2248
        %v2281 = vadd.f32 %v2017, %v2249
        %v2282 = vadd.f32 %v2018, %v2250
        %v2283 = vadd.f32 %v2019, %v2251
        %v2284 = vadd.f32 %v2020, %v2252
        %v2285 = vadd.f32 %v2021, %v2253
        %v2286 = vadd.f32 %v2022, %v2254
        %v2287 = vadd.f32 %v2023, %v2255
        %v2288 = vadd.f32 %v2024, %v2256
        %v2289 = vadd.f32 %v2025, %v2257
        %v2290 = vadd.f32 %v2026, %v2258
        %v2291 = vadd.f32 %v2027, %v2259
        %v2292 = vadd.f32 %v2028, %v2260
        %v2293 = vadd.f32 %v2029, %v2261
        %v2294 = vadd.f32 %v2030, %v2262
        %v2295 = vadd.f32 %v2031, %v2263
        %v2296 = vadd.f32 %v2032, %v2264
        %v2297 = vadd.f32 %v2033, %v2265
        %v2298 = vadd.f32 %v2034, %v2266
        %v2299 = vadd.f32 %v2035, %v2267
        %v2300 = vadd.f32 %v2036, %v2268
        %v2301 = vadd.f32 %v2037, %v2269
        %v2302 = vadd.f32 %v2038, %v2270
        %v2303 = vadd.f32 %v2039, %v2271
        %v2304 = vadd.f32 %v2040, %v2272
        %v2305 = vadd.f32 %v2041, %v2273
        %v2306 = vadd.f32 %v2042, %v2274
        %v2307 = vadd.f32 %v2043, %v2275
        %v2308 = vadd.f32 %v2044, %v2276
        %v2309 = vld [vmem:[%s1780 + $0x2] sm:$0xff]
        %v2310 = vld [vmem:[%s1780 + $0xa] sm:$0xff]
        %v2311 = vld [vmem:[%s1780 + $0x1a] sm:$0xff]
        %v2312 = vld [vmem:[%s1780 + $0x22] sm:$0xff]
        %v2313 = vld [vmem:[%s1780 + $0x32] sm:$0xff]
        %v2314 = vld [vmem:[%s1780 + $0x3a] sm:$0xff]
        %v2315 = vld [vmem:[%s1780 + $0x4a] sm:$0xff]
        %v2316 = vld [vmem:[%s1780 + $0x52] sm:$0xff]
        %v2317 = vld [vmem:[%s1780 + $0x62] sm:$0xff]
        %v2318 = vld [vmem:[%s1780 + $0x6a] sm:$0xff]
        %v2319 = vld [vmem:[%s1780 + $0x7a] sm:$0xff]
        %v2320 = vld [vmem:[%s1780 + $0x82] sm:$0xff]
        %v2321 = vld [vmem:[%s1780 + $0x92] sm:$0xff]
        %v2322 = vld [vmem:[%s1780 + $0x9a] sm:$0xff]
        %v2323 = vld [vmem:[%s1780 + $0xaa] sm:$0xff]
        %v2324 = vld [vmem:[%s1780 + $0xb2] sm:$0xff]
        %v2325 = vld [vmem:[%s1780 + $0xc2] sm:$0xff]
        %v2326 = vld [vmem:[%s1780 + $0xca] sm:$0xff]
        %v2327 = vld [vmem:[%s1780 + $0xda] sm:$0xff]
        %v2328 = vld [vmem:[%s1780 + $0xe2] sm:$0xff]
        %v2329 = vld [vmem:[%s1780 + $0xf2] sm:$0xff]
        %v2330 = vld [vmem:[%s1780 + $0xfa] sm:$0xff]
        %v2331 = vld [vmem:[%s1780 + $0x10a] sm:$0xff]
        %v2332 = vld [vmem:[%s1780 + $0x112] sm:$0xff]
        %v2333 = vld [vmem:[%s1780 + $0x122] sm:$0xff]
        %v2334 = vld [vmem:[%s1780 + $0x12a] sm:$0xff]
        %v2335 = vld [vmem:[%s1780 + $0x13a] sm:$0xff]
        %v2336 = vld [vmem:[%s1780 + $0x142] sm:$0xff]
        %v2337 = vld [vmem:[%s1780 + $0x152] sm:$0xff]
        %v2338 = vld [vmem:[%s1780 + $0x15a] sm:$0xff]
        %v2339 = vld [vmem:[%s1780 + $0x16a] sm:$0xff]
        %v2340 = vld [vmem:[%s1780 + $0x172] sm:$0xff]
        %s2341 = scalar_lea.vmem %s1, 8
        %v2342 = vld [vmem:[%s2341] sm:$0x1]
        %2344 = vset.pattern.permute.xlu0 0
        %2345 = vperm.xlu0 %2344, %v2309
        %v2346 = vpop.permute.xlu0 %2345
        %2349 = vset.pattern.permute.xlu0 0
        %2350 = vperm.xlu0 %2349, %v2310
        %v2351 = vpop.permute.xlu0 %2350
        %2354 = vset.pattern.permute.xlu0 0
        %2355 = vperm.xlu0 %2354, %v2311
        %v2356 = vpop.permute.xlu0 %2355
        %2359 = vset.pattern.permute.xlu0 0
        %2360 = vperm.xlu0 %2359, %v2312
        %v2361 = vpop.permute.xlu0 %2360
        %2364 = vset.pattern.permute.xlu0 0
        %2365 = vperm.xlu0 %2364, %v2313
        %v2366 = vpop.permute.xlu0 %2365
        %2369 = vset.pattern.permute.xlu0 0
        %2370 = vperm.xlu0 %2369, %v2314
        %v2371 = vpop.permute.xlu0 %2370
        %2374 = vset.pattern.permute.xlu0 0
        %2375 = vperm.xlu0 %2374, %v2315
        %v2376 = vpop.permute.xlu0 %2375
        %2379 = vset.pattern.permute.xlu0 0
        %2380 = vperm.xlu0 %2379, %v2316
        %v2381 = vpop.permute.xlu0 %2380
        %2384 = vset.pattern.permute.xlu0 0
        %2385 = vperm.xlu0 %2384, %v2317
        %v2386 = vpop.permute.xlu0 %2385
        %2389 = vset.pattern.permute.xlu0 0
        %2390 = vperm.xlu0 %2389, %v2318
        %v2391 = vpop.permute.xlu0 %2390
        %2394 = vset.pattern.permute.xlu0 0
        %2395 = vperm.xlu0 %2394, %v2319
        %v2396 = vpop.permute.xlu0 %2395
        %2399 = vset.pattern.permute.xlu0 0
        %2400 = vperm.xlu0 %2399, %v2320
        %v2401 = vpop.permute.xlu0 %2400
        %2404 = vset.pattern.permute.xlu0 0
        %2405 = vperm.xlu0 %2404, %v2321
        %v2406 = vpop.permute.xlu0 %2405
        %2409 = vset.pattern.permute.xlu0 0
        %2410 = vperm.xlu0 %2409, %v2322
        %v2411 = vpop.permute.xlu0 %2410
        %2414 = vset.pattern.permute.xlu0 0
        %2415 = vperm.xlu0 %2414, %v2323
        %v2416 = vpop.permute.xlu0 %2415
        %2419 = vset.pattern.permute.xlu0 0
        %2420 = vperm.xlu0 %2419, %v2324
        %v2421 = vpop.permute.xlu0 %2420
        %2424 = vset.pattern.permute.xlu0 0
        %2425 = vperm.xlu0 %2424, %v2325
        %v2426 = vpop.permute.xlu0 %2425
        %2429 = vset.pattern.permute.xlu0 0
        %2430 = vperm.xlu0 %2429, %v2326
        %v2431 = vpop.permute.xlu0 %2430
        %2434 = vset.pattern.permute.xlu0 0
        %2435 = vperm.xlu0 %2434, %v2327
        %v2436 = vpop.permute.xlu0 %2435
        %2439 = vset.pattern.permute.xlu0 0
        %2440 = vperm.xlu0 %2439, %v2328
        %v2441 = vpop.permute.xlu0 %2440
        %2444 = vset.pattern.permute.xlu0 0
        %2445 = vperm.xlu0 %2444, %v2329
        %v2446 = vpop.permute.xlu0 %2445
        %2449 = vset.pattern.permute.xlu0 0
        %2450 = vperm.xlu0 %2449, %v2330
        %v2451 = vpop.permute.xlu0 %2450
        %2454 = vset.pattern.permute.xlu0 0
        %2455 = vperm.xlu0 %2454, %v2331
        %v2456 = vpop.permute.xlu0 %2455
        %2459 = vset.pattern.permute.xlu0 0
        %2460 = vperm.xlu0 %2459, %v2332
        %v2461 = vpop.permute.xlu0 %2460
        %2464 = vset.pattern.permute.xlu0 0
        %2465 = vperm.xlu0 %2464, %v2333
        %v2466 = vpop.permute.xlu0 %2465
        %2469 = vset.pattern.permute.xlu0 0
        %2470 = vperm.xlu0 %2469, %v2334
        %v2471 = vpop.permute.xlu0 %2470
        %2474 = vset.pattern.permute.xlu0 0
        %2475 = vperm.xlu0 %2474, %v2335
        %v2476 = vpop.permute.xlu0 %2475
        %2479 = vset.pattern.permute.xlu0 0
        %2480 = vperm.xlu0 %2479, %v2336
        %v2481 = vpop.permute.xlu0 %2480
        %2484 = vset.pattern.permute.xlu0 0
        %2485 = vperm.xlu0 %2484, %v2337
        %v2486 = vpop.permute.xlu0 %2485
        %2489 = vset.pattern.permute.xlu0 0
        %2490 = vperm.xlu0 %2489, %v2338
        %v2491 = vpop.permute.xlu0 %2490
        %2494 = vset.pattern.permute.xlu0 0
        %2495 = vperm.xlu0 %2494, %v2339
        %v2496 = vpop.permute.xlu0 %2495
        %2499 = vset.pattern.permute.xlu0 0
        %2500 = vperm.xlu0 %2499, %v2340
        %v2501 = vpop.permute.xlu0 %2500
        %v2504 = vlaneseq
        %v2505 = vshrl.u32 %v2504, 7
        %v2506 = vsub.s32 0, %v2505
        %v2507 = vrot.slane %v2342, %v2506
        %v2509 = vmul.f32 %v2346, %v2507
        %v2510 = vmul.f32 %v2351, %v2507
        %v2511 = vmul.f32 %v2356, %v2507
        %v2512 = vmul.f32 %v2361, %v2507
        %v2513 = vmul.f32 %v2366, %v2507
        %v2514 = vmul.f32 %v2371, %v2507
        %v2515 = vmul.f32 %v2376, %v2507
        %v2516 = vmul.f32 %v2381, %v2507
        %v2517 = vmul.f32 %v2386, %v2507
        %v2518 = vmul.f32 %v2391, %v2507
        %v2519 = vmul.f32 %v2396, %v2507
        %v2520 = vmul.f32 %v2401, %v2507
        %v2521 = vmul.f32 %v2406, %v2507
        %v2522 = vmul.f32 %v2411, %v2507
        %v2523 = vmul.f32 %v2416, %v2507
        %v2524 = vmul.f32 %v2421, %v2507
        %v2525 = vmul.f32 %v2426, %v2507
        %v2526 = vmul.f32 %v2431, %v2507
        %v2527 = vmul.f32 %v2436, %v2507
        %v2528 = vmul.f32 %v2441, %v2507
        %v2529 = vmul.f32 %v2446, %v2507
        %v2530 = vmul.f32 %v2451, %v2507
        %v2531 = vmul.f32 %v2456, %v2507
        %v2532 = vmul.f32 %v2461, %v2507
        %v2533 = vmul.f32 %v2466, %v2507
        %v2534 = vmul.f32 %v2471, %v2507
        %v2535 = vmul.f32 %v2476, %v2507
        %v2536 = vmul.f32 %v2481, %v2507
        %v2537 = vmul.f32 %v2486, %v2507
        %v2538 = vmul.f32 %v2491, %v2507
        %v2539 = vmul.f32 %v2496, %v2507
        %v2540 = vmul.f32 %v2501, %v2507
        %v2541 = vadd.f32 %v2277, %v2509
        %v2542 = vadd.f32 %v2278, %v2510
        %v2543 = vadd.f32 %v2279, %v2511
        %v2544 = vadd.f32 %v2280, %v2512
        %v2545 = vadd.f32 %v2281, %v2513
        %v2546 = vadd.f32 %v2282, %v2514
        %v2547 = vadd.f32 %v2283, %v2515
        %v2548 = vadd.f32 %v2284, %v2516
        %v2549 = vadd.f32 %v2285, %v2517
        %v2550 = vadd.f32 %v2286, %v2518
        %v2551 = vadd.f32 %v2287, %v2519
        %v2552 = vadd.f32 %v2288, %v2520
        %v2553 = vadd.f32 %v2289, %v2521
        %v2554 = vadd.f32 %v2290, %v2522
        %v2555 = vadd.f32 %v2291, %v2523
        %v2556 = vadd.f32 %v2292, %v2524
        %v2557 = vadd.f32 %v2293, %v2525
        %v2558 = vadd.f32 %v2294, %v2526
        %v2559 = vadd.f32 %v2295, %v2527
        %v2560 = vadd.f32 %v2296, %v2528
        %v2561 = vadd.f32 %v2297, %v2529
        %v2562 = vadd.f32 %v2298, %v2530
        %v2563 = vadd.f32 %v2299, %v2531
        %v2564 = vadd.f32 %v2300, %v2532
        %v2565 = vadd.f32 %v2301, %v2533
        %v2566 = vadd.f32 %v2302, %v2534
        %v2567 = vadd.f32 %v2303, %v2535
        %v2568 = vadd.f32 %v2304, %v2536
        %v2569 = vadd.f32 %v2305, %v2537
        %v2570 = vadd.f32 %v2306, %v2538
        %v2571 = vadd.f32 %v2307, %v2539
        %v2572 = vadd.f32 %v2308, %v2540
        %v2573 = vld [vmem:[%s2] sm:$0x1]
        %v2575 = vlaneseq
        %v2576 = vshrl.u32 %v2575, 7
        %v2577 = vsub.s32 0, %v2576
        %v2578 = vrot.slane %v2573, %v2577
        %v2580 = vmul.f32 %v2541, %v2578
        %v2581 = vmul.f32 %v2542, %v2578
        %v2582 = vmul.f32 %v2543, %v2578
        %v2583 = vmul.f32 %v2544, %v2578
        %v2584 = vmul.f32 %v2545, %v2578
        %v2585 = vmul.f32 %v2546, %v2578
        %v2586 = vmul.f32 %v2547, %v2578
        %v2587 = vmul.f32 %v2548, %v2578
        %v2588 = vmul.f32 %v2549, %v2578
        %v2589 = vmul.f32 %v2550, %v2578
        %v2590 = vmul.f32 %v2551, %v2578
        %v2591 = vmul.f32 %v2552, %v2578
        %v2592 = vmul.f32 %v2553, %v2578
        %v2593 = vmul.f32 %v2554, %v2578
        %v2594 = vmul.f32 %v2555, %v2578
        %v2595 = vmul.f32 %v2556, %v2578
        %v2596 = vmul.f32 %v2557, %v2578
        %v2597 = vmul.f32 %v2558, %v2578
        %v2598 = vmul.f32 %v2559, %v2578
        %v2599 = vmul.f32 %v2560, %v2578
        %v2600 = vmul.f32 %v2561, %v2578
        %v2601 = vmul.f32 %v2562, %v2578
        %v2602 = vmul.f32 %v2563, %v2578
        %v2603 = vmul.f32 %v2564, %v2578
        %v2604 = vmul.f32 %v2565, %v2578
        %v2605 = vmul.f32 %v2566, %v2578
        %v2606 = vmul.f32 %v2567, %v2578
        %v2607 = vmul.f32 %v2568, %v2578
        %v2608 = vmul.f32 %v2569, %v2578
        %v2609 = vmul.f32 %v2570, %v2578
        %v2610 = vmul.f32 %v2571, %v2578
        %v2611 = vmul.f32 %v2572, %v2578
        %v2612 = vld [vmem:[%s3] sm:$0x1]
        %v2614 = vlaneseq
        %v2615 = vshrl.u32 %v2614, 7
        %v2616 = vsub.s32 0, %v2615
        %v2617 = vrot.slane %v2612, %v2616
        %v2619 = vadd.f32 %v2580, %v2617
        %v2620 = vadd.f32 %v2581, %v2617
        %v2621 = vadd.f32 %v2582, %v2617
        %v2622 = vadd.f32 %v2583, %v2617
        %v2623 = vadd.f32 %v2584, %v2617
        %v2624 = vadd.f32 %v2585, %v2617
        %v2625 = vadd.f32 %v2586, %v2617
        %v2626 = vadd.f32 %v2587, %v2617
        %v2627 = vadd.f32 %v2588, %v2617
        %v2628 = vadd.f32 %v2589, %v2617
        %v2629 = vadd.f32 %v2590, %v2617
        %v2630 = vadd.f32 %v2591, %v2617
        %v2631 = vadd.f32 %v2592, %v2617
        %v2632 = vadd.f32 %v2593, %v2617
        %v2633 = vadd.f32 %v2594, %v2617
        %v2634 = vadd.f32 %v2595, %v2617
        %v2635 = vadd.f32 %v2596, %v2617
        %v2636 = vadd.f32 %v2597, %v2617
        %v2637 = vadd.f32 %v2598, %v2617
        %v2638 = vadd.f32 %v2599, %v2617
        %v2639 = vadd.f32 %v2600, %v2617
        %v2640 = vadd.f32 %v2601, %v2617
        %v2641 = vadd.f32 %v2602, %v2617
        %v2642 = vadd.f32 %v2603, %v2617
        %v2643 = vadd.f32 %v2604, %v2617
        %v2644 = vadd.f32 %v2605, %v2617
        %v2645 = vadd.f32 %v2606, %v2617
        %v2646 = vadd.f32 %v2607, %v2617
        %v2647 = vadd.f32 %v2608, %v2617
        %v2648 = vadd.f32 %v2609, %v2617
        %v2649 = vadd.f32 %v2610, %v2617
        %v2650 = vadd.f32 %v2611, %v2617
        %v2651 = vmax.f32 %v2619, 0.0
        %v2652 = vmax.f32 %v2620, 0.0
        %v2653 = vmax.f32 %v2621, 0.0
        %v2654 = vmax.f32 %v2622, 0.0
        %v2655 = vmax.f32 %v2623, 0.0
        %v2656 = vmax.f32 %v2624, 0.0
        %v2657 = vmax.f32 %v2625, 0.0
        %v2658 = vmax.f32 %v2626, 0.0
        %v2659 = vmax.f32 %v2627, 0.0
        %v2660 = vmax.f32 %v2628, 0.0
        %v2661 = vmax.f32 %v2629, 0.0
        %v2662 = vmax.f32 %v2630, 0.0
        %v2663 = vmax.f32 %v2631, 0.0
        %v2664 = vmax.f32 %v2632, 0.0
        %v2665 = vmax.f32 %v2633, 0.0
        %v2666 = vmax.f32 %v2634, 0.0
        %v2667 = vmax.f32 %v2635, 0.0
        %v2668 = vmax.f32 %v2636, 0.0
        %v2669 = vmax.f32 %v2637, 0.0
        %v2670 = vmax.f32 %v2638, 0.0
        %v2671 = vmax.f32 %v2639, 0.0
        %v2672 = vmax.f32 %v2640, 0.0
        %v2673 = vmax.f32 %v2641, 0.0
        %v2674 = vmax.f32 %v2642, 0.0
        %v2675 = vmax.f32 %v2643, 0.0
        %v2676 = vmax.f32 %v2644, 0.0
        %v2677 = vmax.f32 %v2645, 0.0
        %v2678 = vmax.f32 %v2646, 0.0
        %v2679 = vmax.f32 %v2647, 0.0
        %v2680 = vmax.f32 %v2648, 0.0
        %v2681 = vmax.f32 %v2649, 0.0
        %v2682 = vmax.f32 %v2650, 0.0
        %vm2683 = vcmask 261120
        %2684 = vst.msk [vmem:[%s190] sm:$0xff] %vm2683, %v2651
        %2685 = vst.msk [vmem:[%s190 + $0x8] sm:$0xff] %vm2683, %v2652
        %2686 = vst.msk [vmem:[%s190 + $0x10] sm:$0xff] %vm2683, %v2653
        %2687 = vst.msk [vmem:[%s190 + $0x18] sm:$0xff] %vm2683, %v2654
        %2688 = vst.msk [vmem:[%s190 + $0x20] sm:$0xff] %vm2683, %v2655
        %2689 = vst.msk [vmem:[%s190 + $0x28] sm:$0xff] %vm2683, %v2656
        %2690 = vst.msk [vmem:[%s190 + $0x30] sm:$0xff] %vm2683, %v2657
        %2691 = vst.msk [vmem:[%s190 + $0x38] sm:$0xff] %vm2683, %v2658
        %2692 = vst.msk [vmem:[%s190 + $0x40] sm:$0xff] %vm2683, %v2659
        %2693 = vst.msk [vmem:[%s190 + $0x48] sm:$0xff] %vm2683, %v2660
        %2694 = vst.msk [vmem:[%s190 + $0x50] sm:$0xff] %vm2683, %v2661
        %2695 = vst.msk [vmem:[%s190 + $0x58] sm:$0xff] %vm2683, %v2662
        %2696 = vst.msk [vmem:[%s190 + $0x60] sm:$0xff] %vm2683, %v2663
        %2697 = vst.msk [vmem:[%s190 + $0x68] sm:$0xff] %vm2683, %v2664
        %2698 = vst.msk [vmem:[%s190 + $0x70] sm:$0xff] %vm2683, %v2665
        %2699 = vst.msk [vmem:[%s190 + $0x78] sm:$0xff] %vm2683, %v2666
        %2700 = vst.msk [vmem:[%s190 + $0x80] sm:$0xff] %vm2683, %v2667
        %2701 = vst.msk [vmem:[%s190 + $0x88] sm:$0xff] %vm2683, %v2668
        %2702 = vst.msk [vmem:[%s190 + $0x90] sm:$0xff] %vm2683, %v2669
        %2703 = vst.msk [vmem:[%s190 + $0x98] sm:$0xff] %vm2683, %v2670
        %2704 = vst.msk [vmem:[%s190 + $0xa0] sm:$0xff] %vm2683, %v2671
        %2705 = vst.msk [vmem:[%s190 + $0xa8] sm:$0xff] %vm2683, %v2672
        %2706 = vst.msk [vmem:[%s190 + $0xb0] sm:$0xff] %vm2683, %v2673
        %2707 = vst.msk [vmem:[%s190 + $0xb8] sm:$0xff] %vm2683, %v2674
        %2708 = vst.msk [vmem:[%s190 + $0xc0] sm:$0xff] %vm2683, %v2675
        %2709 = vst.msk [vmem:[%s190 + $0xc8] sm:$0xff] %vm2683, %v2676
        %2710 = vst.msk [vmem:[%s190 + $0xd0] sm:$0xff] %vm2683, %v2677
        %2711 = vst.msk [vmem:[%s190 + $0xd8] sm:$0xff] %vm2683, %v2678
        %2712 = vst.msk [vmem:[%s190 + $0xe0] sm:$0xff] %vm2683, %v2679
        %2713 = vst.msk [vmem:[%s190 + $0xe8] sm:$0xff] %vm2683, %v2680
        %2714 = vst.msk [vmem:[%s190 + $0xf0] sm:$0xff] %vm2683, %v2681
        %2715 = vst.msk [vmem:[%s190 + $0xf8] sm:$0xff] %vm2683, %v2682
        %s2716 = sand.u32 %s115, 1
        %s2717 = scalar_lea.sflag [#allocation3], %s2716
        %s2718 = sand.u32 %s115, 1
        %s2719 = smul.addr %s2718, 256
        %s2720 = scalar_lea.vmem [#allocation2], %s2719
        // Predicated region
        $region37: #{tpu_custom_call.1} parent=35 // pred_check
          %p2721 = pneg %p125
        $region38: #{tpu_custom_call.1} parent=35 // pred_check_branch
          %2723 = sbr.rel (%p2721) target = $region40
        $region39: #{tpu_custom_call.1} parent=35 // pred_region
          %s2725 = ssub.s32 4096, 4096
          %2726 = vsyncadd %s2717, %s2725
          %s2727 = smul.addr %s18, 32
          %s2728 = smul.addr %s2727, 128
          %s2729 = scalar_lea.hbm %s4, %s2728
          %s2730 = sshll.u32 %s2720, 4
          %s2731 = int_to_ptr.vmem [resolvable:$true] %s2730
          %2736 = dma.vmem_to_hbm [thread:$0]  %s2731, 4096, %s2729, %s2717, 128, 128, 8
        $region40: #{tpu_custom_call.1} parent=35 // pred_fallthru
          _
      $region36: #{tpu_custom_call.1} parent=5 // pred_fallthru
        _
      %p2737 = scmp.le.s32.totalorder 2, %s13
      // Predicated region
      $region41: #{tpu_custom_call.1} parent=5 // pred_check
        %p2738 = pneg %p2737
      $region42: #{tpu_custom_call.1} parent=5 // pred_check_branch
        %2740 = sbr.rel (%p2738) target = $region44
      $region43: #{tpu_custom_call.1} parent=5 // pred_region
        %s2741 = ssub.s32 %s13, 2
        // Predicated region
        $region45: #{tpu_custom_call.1} parent=43 // pred_check
          %p2742 = pneg %p131
        $region46: #{tpu_custom_call.1} parent=43 // pred_check_branch
          %2744 = sbr.rel (%p2742) target = $region48
        $region47: #{tpu_custom_call.1} parent=43 // pred_region
          %s2745 = sand.u32 %s116, 1
          %s2746 = scalar_lea.sflag [#allocation3], %s2745
          %s2747 = sand.u32 %s116, 1
          %s2748 = smul.addr %s2747, 256
          %s2749 = scalar_lea.vmem [#allocation2], %s2748
          %2750 = dma.done %s2746, 4096
        $region48: #{tpu_custom_call.1} parent=43 // pred_fallthru
          _
      $region44: #{tpu_custom_call.1} parent=5 // pred_fallthru
        _
    $region6: #{tpu_custom_call.1} parent=1 // loop_footer
      %s17 = sadd.s32 1, %s13
    $region7: #{tpu_custom_call.1} parent=1 // loop_footer_branch
      %12 = sbr.rel target = $region3
    $region8: #{tpu_custom_call.1} parent=1 // loop_exit
      _
    %2751 = vsyncpa [#allocation3], 1
    %s2752 = scalar_lea.sflag [#allocation3], 1
    %2753 = vsyncpa %s2752, 1

</llo_original>
